<compile_context>
chip_gen: v7x
topology: tpu7x:2x2x1
jax: 0.10.0
libtpu: 0.0.40
codegen_flags: <defaults>
</compile_context>

<pallas_src>
import jax
import jax.numpy as jnp
import numpy as np
from jax.experimental import pallas as pl
from jax.experimental.pallas import tpu as pltpu


def _conv_out(size, kernel, stride, padding):
    return (size + 2 * padding - kernel) // stride + 1


# --------------------------- host-side prep (numpy) ------------------------- #

def _toeplitz_weight(w_hwio, w_in, ow, stride, pad):
    """(3,3,Cin,Cout) conv weight -> (3, W_in*Cin, OW*Cout) width-Toeplitz stack.

    One GEMM against stack[kh] performs the whole width dimension of the conv
    (3 taps, stride, zero padding) for kernel row kh."""
    kh_, kw_, cin, cout = w_hwio.shape
    out = np.zeros((kh_, w_in * cin, ow * cout), np.float32)
    for i in range(kh_):
        for o in range(ow):
            for j in range(kw_):
                col = stride * o + j - pad
                if 0 <= col < w_in:
                    out[i, col * cin:(col + 1) * cin,
                        o * cout:(o + 1) * cout] = np.asarray(w_hwio[i, j])
    return out


def _row_select(n, h_in, oh, stride, pad):
    """(3, N*OH, N*H_in) 0/1 matrices: tap-row kh reads input row
    stride*oh + kh - pad of the same image (all-zero row == zero padding)."""
    out = np.zeros((3, n * oh, n * h_in), np.float32)
    for kh in range(3):
        for b in range(n):
            for o in range(oh):
                h = stride * o + kh - pad
                if 0 <= h < h_in:
                    out[kh, b * oh + o, b * h_in + h] = 1.0
    return out


def _chan_avg(ow, c):
    """(OW*C, OW*C): right-multiplying a per-(ow,c) row mean by this yields the
    per-channel mean broadcast back over ow (lane-space averaging GEMM)."""
    m = np.zeros((ow * c, ow * c), np.float32)
    for o in range(ow):
        for o2 in range(ow):
            for ch in range(c):
                m[o * c + ch, o2 * c + ch] = 1.0 / ow
    return m


def _group_select(n, oh3):
    """(OH3, N, N*OH3) 0/1 matrices grouping conv3 output rows by image for the
    fused flatten+linear1: h[n] += (gsel[r] @ relu(conv3)) @ wl1_block[r]."""
    g = np.zeros((oh3, n, n * oh3), np.float32)
    for r in range(oh3):
        for b in range(n):
            g[r, b, b * oh3 + r] = 1.0
    return g


# ------------------------------ fused kernel -------------------------------- #

def _encoder_kernel(x_ref,
                    sel1_ref, wt1_ref, b1_ref,
                    sel2_ref, wt2_ref, b2_ref,
                    mavg_ref, gam_ref, bet_ref,
                    sel3_ref, wt3_ref, b3_ref,
                    gsel_ref, wl1_ref, bl1_ref, wl2_ref, bl2_ref,
                    o_ref):
    f32 = jnp.float32

    def conv3x3_s2(a, sel, wt, bias_row):
        # Whole conv layer as 6 GEMMs: per kernel-row tap a row-selection GEMM
        # then a width-Toeplitz GEMM, accumulated in f32; bias folded in once.
        z = bias_row
        for kh in range(sel.shape[0]):
            rows = jnp.dot(sel[kh], a, preferred_element_type=f32)
            z = z + jnp.dot(rows, wt[kh], preferred_element_type=f32)
        return z

    a0 = x_ref[...]                                           # (N*H, W*Cin)

    # conv1 (Cin->8, s2, p1) + ReLU
    a1 = jnp.maximum(conv3x3_s2(a0, sel1_ref[...], wt1_ref[...], b1_ref[...]), 0.0)

    # conv2 (8->16, s2, p1)
    z2 = conv3x3_s2(a1, sel2_ref[...], wt2_ref[...], b2_ref[...])

    # BatchNorm2d(16), train-mode batch statistics (biased variance), + ReLU.
    mavg = mavg_ref[...]
    mean = jnp.dot(jnp.mean(z2, axis=0, keepdims=True), mavg,
                   preferred_element_type=f32)
    var = jnp.dot(jnp.mean(jnp.square(z2 - mean), axis=0, keepdims=True), mavg,
                  preferred_element_type=f32)
    a2 = (z2 - mean) * jax.lax.rsqrt(var + 1e-5) * gam_ref[...] + bet_ref[...]
    a2 = jnp.maximum(a2, 0.0)

    # conv3 (16->32, s2, p0) + ReLU
    a3 = jnp.maximum(conv3x3_s2(a2, sel3_ref[...], wt3_ref[...], b3_ref[...]), 0.0)

    # flatten (PyTorch NCHW order folded into wl1 blocks) + Linear(->128) + ReLU.
    gsel = gsel_ref[...]
    wl1 = wl1_ref[...]
    h = bl1_ref[...]
    for r in range(gsel.shape[0]):                            # OH3 (static)
        h = h + jnp.dot(jnp.dot(gsel[r], a3, preferred_element_type=f32),
                        wl1[r], preferred_element_type=f32)
    h = jnp.maximum(h, 0.0)

    # Linear(128 -> latent)
    o_ref[...] = (jnp.dot(h, wl2_ref[...], preferred_element_type=f32)
                  + bl2_ref[...]).astype(o_ref.dtype)


# ------------------------------ host wrapper -------------------------------- #

@jax.jit
def encoder_forward(params, x_nchw):
    n, c_in, h, w = x_nchw.shape
    oh1, ow1 = _conv_out(h, 3, 2, 1), _conv_out(w, 3, 2, 1)
    oh2, ow2 = _conv_out(oh1, 3, 2, 1), _conv_out(ow1, 3, 2, 1)
    oh3, _ = _conv_out(oh2, 3, 2, 0), _conv_out(ow2, 3, 2, 0)
    latent = params["bl2"].shape[-1]

    # NCHW -> NHWC -> lane-dense (N*H, W*C) slab (only XLA glue outside kernel).
    x = jnp.transpose(x_nchw, (0, 2, 3, 1)).astype(jnp.float32).reshape(n * h, w * c_in)

    # Batch/geometry-dependent 0/1 selection matrices (trace-time constants).
    sel1 = _row_select(n, h, oh1, 2, 1)
    sel2 = _row_select(n, oh1, oh2, 2, 1)
    sel3 = _row_select(n, oh2, oh3, 2, 0)
    gsel = _group_select(n, oh3)

    vmem = pl.BlockSpec(memory_space=pltpu.MemorySpace.VMEM)
    return pl.pallas_call(
        _encoder_kernel,
        out_shape=jax.ShapeDtypeStruct((n, latent), jnp.float32),
        in_specs=[vmem] * 18,
        out_specs=vmem,
        compiler_params=pltpu.CompilerParams(vmem_limit_bytes=32 * 1024 * 1024),
    )(x, sel1, params["wt1"], params["b1"],
      sel2, params["wt2"], params["b2"],
      params["mavg"], params["bn_g"], params["bn_b"],
      sel3, params["wt3"], params["b3"],
      gsel, params["wl1"], params["bl1"], params["wl2"], params["bl2"])


# ------------------------------ parameters ---------------------------------- #

def init_encoder_params(key, input_size, latent_dim):
    """Random parameters in PyTorch-equivalent layout: conv weights (KH,KW,IC,OC),
    linear weights (in,out) with NCHW-flatten row order, 1-D biases."""
    c_in, h, w = input_size
    oh1, ow1 = _conv_out(h, 3, 2, 1), _conv_out(w, 3, 2, 1)
    oh2, ow2 = _conv_out(oh1, 3, 2, 1), _conv_out(ow1, 3, 2, 1)
    oh3, ow3 = _conv_out(oh2, 3, 2, 0), _conv_out(ow2, 3, 2, 0)
    feature_size = 32 * oh3 * ow3

    keys = jax.random.split(key, 10)

    def conv_w(k, ic, oc):
        return jax.random.normal(k, (3, 3, ic, oc), jnp.float32) / jnp.sqrt(9.0 * ic)

    def lin_w(k, fin, fout):
        return jax.random.normal(k, (fin, fout), jnp.float32) / jnp.sqrt(float(fin))

    return {
        "w1": conv_w(keys[0], c_in, 8),
        "b1": 0.01 * jax.random.normal(keys[1], (8,), jnp.float32),
        "w2": conv_w(keys[2], 8, 16),
        "b2": 0.01 * jax.random.normal(keys[3], (16,), jnp.float32),
        "bn_g": jnp.ones((16,), jnp.float32),
        "bn_b": jnp.zeros((16,), jnp.float32),
        "w3": conv_w(keys[4], 16, 32),
        "b3": 0.01 * jax.random.normal(keys[5], (32,), jnp.float32),
        "wl1": lin_w(keys[6], feature_size, 128),
        "bl1": 0.01 * jax.random.normal(keys[7], (128,), jnp.float32),
        "wl2": lin_w(keys[8], 128, latent_dim),
        "bl2": 0.01 * jax.random.normal(keys[9], (latent_dim,), jnp.float32),
    }


def prepare_params(raw, input_size):
    """One-time host re-layout so the kernel only needs plain 2-D GEMMs:
       * conv weights -> per-kernel-row width-Toeplitz stacks (stride/pad folded in)
       * biases / BN affine -> lane-dense (1, OW*C) rows
       * wl1 rows permuted from NCHW-flatten order and split per conv3 output row
         (folds nn.Flatten into the first Linear)."""
    _, h, w = input_size
    oh1, ow1 = _conv_out(h, 3, 2, 1), _conv_out(w, 3, 2, 1)
    oh2, ow2 = _conv_out(oh1, 3, 2, 1), _conv_out(ow1, 3, 2, 1)
    oh3, ow3 = _conv_out(oh2, 3, 2, 0), _conv_out(ow2, 3, 2, 0)
    c2, c3 = raw["w2"].shape[-1], raw["w3"].shape[-1]
    m = raw["wl1"].shape[-1]

    wl1_blocks = (np.asarray(raw["wl1"]).reshape(c3, oh3, ow3, m)
                  .transpose(1, 2, 0, 3).reshape(oh3, ow3 * c3, m))

    def tile_row(v, reps):
        return np.tile(np.asarray(v), reps)[None, :].astype(np.float32)

    return {
        "wt1": jnp.asarray(_toeplitz_weight(np.asarray(raw["w1"]), w, ow1, 2, 1)),
        "b1": jnp.asarray(tile_row(raw["b1"], ow1)),
        "wt2": jnp.asarray(_toeplitz_weight(np.asarray(raw["w2"]), ow1, ow2, 2, 1)),
        "b2": jnp.asarray(tile_row(raw["b2"], ow2)),
        "mavg": jnp.asarray(_chan_avg(ow2, c2)),
        "bn_g": jnp.asarray(tile_row(raw["bn_g"], ow2)),
        "bn_b": jnp.asarray(tile_row(raw["bn_b"], ow2)),
        "wt3": jnp.asarray(_toeplitz_weight(np.asarray(raw["w3"]), ow2, ow3, 2, 0)),
        "b3": jnp.asarray(tile_row(raw["b3"], ow3)),
        "wl1": jnp.asarray(wl1_blocks.astype(np.float32)),
        "bl1": jnp.asarray(np.asarray(raw["bl1"])[None, :]),
        "wl2": raw["wl2"],
        "bl2": jnp.asarray(np.asarray(raw["bl2"])[None, :]),
    }


# ------------------------------ reference ----------------------------------- #

def _reference_forward(raw, x_nchw, eps=1e-5):
    """Pure-JAX/XLA reference of the PyTorch Encoder forward (train-mode BN)."""
    hi = jax.lax.Precision.HIGHEST
    dn = ("NHWC", "HWIO", "NHWC")
    x = jnp.transpose(x_nchw, (0, 2, 3, 1)).astype(jnp.float32)
    x = jax.lax.conv_general_dilated(x, raw["w1"], (2, 2), ((1, 1), (1, 1)),
                                     dimension_numbers=dn, precision=hi) + raw["b1"]
    x = jnp.maximum(x, 0.0)
    x = jax.lax.conv_general_dilated(x, raw["w2"], (2, 2), ((1, 1), (1, 1)),
                                     dimension_numbers=dn, precision=hi) + raw["b2"]
    mean = jnp.mean(x, axis=(0, 1, 2), keepdims=True)
    var = jnp.mean(jnp.square(x - mean), axis=(0, 1, 2), keepdims=True)
    x = (x - mean) * jax.lax.rsqrt(var + eps) * raw["bn_g"] + raw["bn_b"]
    x = jnp.maximum(x, 0.0)
    x = jax.lax.conv_general_dilated(x, raw["w3"], (2, 2), ((0, 0), (0, 0)),
                                     dimension_numbers=dn, precision=hi) + raw["b3"]
    x = jnp.maximum(x, 0.0)
    x = jnp.transpose(x, (0, 3, 1, 2)).reshape(x.shape[0], -1)   # NCHW flatten
    x = jnp.maximum(jnp.dot(x, raw["wl1"], precision=hi) + raw["bl1"], 0.0)
    return jnp.dot(x, raw["wl2"], precision=hi) + raw["bl2"]


if __name__ == "__main__":
    batch = 2
    input_size = (4, 16, 16)      # (C, H, W)
    latent_dim = 8

    key = jax.random.PRNGKey(0)
    pkey, xkey = jax.random.split(key)
    raw = init_encoder_params(pkey, input_size, latent_dim)
    params = prepare_params(raw, input_size)

    x = jax.random.normal(xkey, (batch,) + input_size, jnp.float32)   # NCHW

    out = jax.block_until_ready(encoder_forward(params, x))
    assert out.shape == (batch, latent_dim), out.shape
    assert bool(jnp.all(jnp.isfinite(out)))

    ref = jax.block_until_ready(_reference_forward(raw, x))
    assert jnp.allclose(out, ref, rtol=5e-2, atol=5e-2), \
        float(jnp.max(jnp.abs(out - ref)))

    print("KERNEL_OK")
</pallas_src>

<mosaic_0001>
module attributes {stable_mosaic.version = 11 : i64} {
  func.func @_encoder_kernel(%arg0: memref<32x64xf32, #tpu.memory_space<vmem>>, %arg1: memref<3x16x32xf32, #tpu.memory_space<vmem>>, %arg2: memref<3x64x64xf32, #tpu.memory_space<vmem>>, %arg3: memref<1x64xf32, #tpu.memory_space<vmem>>, %arg4: memref<3x8x16xf32, #tpu.memory_space<vmem>>, %arg5: memref<3x64x64xf32, #tpu.memory_space<vmem>>, %arg6: memref<1x64xf32, #tpu.memory_space<vmem>>, %arg7: memref<64x64xf32, #tpu.memory_space<vmem>>, %arg8: memref<1x64xf32, #tpu.memory_space<vmem>>, %arg9: memref<1x64xf32, #tpu.memory_space<vmem>>, %arg10: memref<3x2x8xf32, #tpu.memory_space<vmem>>, %arg11: memref<3x64x32xf32, #tpu.memory_space<vmem>>, %arg12: memref<1x32xf32, #tpu.memory_space<vmem>>, %arg13: memref<1x2x2xf32, #tpu.memory_space<vmem>>, %arg14: memref<1x32x128xf32, #tpu.memory_space<vmem>>, %arg15: memref<1x128xf32, #tpu.memory_space<vmem>>, %arg16: memref<128x8xf32, #tpu.memory_space<vmem>>, %arg17: memref<1x8xf32, #tpu.memory_space<vmem>>, %arg18: memref<2x8xf32, #tpu.memory_space<vmem>>) attributes {dimension_semantics = [], scalar_prefetch = 0 : i64, scratch_operands = 0 : i64, tpu.core_type = #tpu.core_type<tc>} {
    %c0 = arith.constant 0 : index
    %c0_0 = arith.constant 0 : index
    %0 = vector.load %arg0[%c0, %c0_0] : memref<32x64xf32, #tpu.memory_space<vmem>>, vector<32x64xf32>
    %c0_1 = arith.constant 0 : index
    %c0_2 = arith.constant 0 : index
    %c0_3 = arith.constant 0 : index
    %1 = vector.load %arg1[%c0_1, %c0_2, %c0_3] : memref<3x16x32xf32, #tpu.memory_space<vmem>>, vector<3x16x32xf32>
    %c0_4 = arith.constant 0 : index
    %c0_5 = arith.constant 0 : index
    %c0_6 = arith.constant 0 : index
    %2 = vector.load %arg2[%c0_4, %c0_5, %c0_6] : memref<3x64x64xf32, #tpu.memory_space<vmem>>, vector<3x64x64xf32>
    %c0_7 = arith.constant 0 : index
    %c0_8 = arith.constant 0 : index
    %3 = vector.load %arg3[%c0_7, %c0_8] : memref<1x64xf32, #tpu.memory_space<vmem>>, vector<1x64xf32>
    %4 = vector.extract_strided_slice %1 {offsets = [0, 0, 0], sizes = [1, 16, 32], strides = [1, 1, 1]} : vector<3x16x32xf32> to vector<1x16x32xf32>
    %5 = vector.shape_cast %4 : vector<1x16x32xf32> to vector<16x32xf32>
    %cst = arith.constant dense<0.000000e+00> : vector<16x64xf32>
    %6 = tpu.matmul %5, %0, %cst {dimension_numbers = #tpu.dot_dimension_numbers<[1], [0], [0], [1], [0, 0, 1, 1], [], []>} : vector<16x32xf32>, vector<32x64xf32>, vector<16x64xf32> -> vector<16x64xf32>
    %7 = vector.extract_strided_slice %2 {offsets = [0, 0, 0], sizes = [1, 64, 64], strides = [1, 1, 1]} : vector<3x64x64xf32> to vector<1x64x64xf32>
    %8 = vector.shape_cast %7 : vector<1x64x64xf32> to vector<64x64xf32>
    %cst_9 = arith.constant dense<0.000000e+00> : vector<16x64xf32>
    %9 = tpu.matmul %6, %8, %cst_9 {dimension_numbers = #tpu.dot_dimension_numbers<[1], [0], [0], [1], [0, 0, 1, 1], [], []>} : vector<16x64xf32>, vector<64x64xf32>, vector<16x64xf32> -> vector<16x64xf32>
    %10 = vector.broadcast %3 : vector<1x64xf32> to vector<16x64xf32>
    %11 = arith.addf %10, %9 : vector<16x64xf32>
    %12 = vector.extract_strided_slice %1 {offsets = [1, 0, 0], sizes = [1, 16, 32], strides = [1, 1, 1]} : vector<3x16x32xf32> to vector<1x16x32xf32>
    %13 = vector.shape_cast %12 : vector<1x16x32xf32> to vector<16x32xf32>
    %cst_10 = arith.constant dense<0.000000e+00> : vector<16x64xf32>
    %14 = tpu.matmul %13, %0, %cst_10 {dimension_numbers = #tpu.dot_dimension_numbers<[1], [0], [0], [1], [0, 0, 1, 1], [], []>} : vector<16x32xf32>, vector<32x64xf32>, vector<16x64xf32> -> vector<16x64xf32>
    %15 = vector.extract_strided_slice %2 {offsets = [1, 0, 0], sizes = [1, 64, 64], strides = [1, 1, 1]} : vector<3x64x64xf32> to vector<1x64x64xf32>
    %16 = vector.shape_cast %15 : vector<1x64x64xf32> to vector<64x64xf32>
    %cst_11 = arith.constant dense<0.000000e+00> : vector<16x64xf32>
    %17 = tpu.matmul %14, %16, %cst_11 {dimension_numbers = #tpu.dot_dimension_numbers<[1], [0], [0], [1], [0, 0, 1, 1], [], []>} : vector<16x64xf32>, vector<64x64xf32>, vector<16x64xf32> -> vector<16x64xf32>
    %18 = arith.addf %11, %17 : vector<16x64xf32>
    %19 = vector.extract_strided_slice %1 {offsets = [2, 0, 0], sizes = [1, 16, 32], strides = [1, 1, 1]} : vector<3x16x32xf32> to vector<1x16x32xf32>
    %20 = vector.shape_cast %19 : vector<1x16x32xf32> to vector<16x32xf32>
    %cst_12 = arith.constant dense<0.000000e+00> : vector<16x64xf32>
    %21 = tpu.matmul %20, %0, %cst_12 {dimension_numbers = #tpu.dot_dimension_numbers<[1], [0], [0], [1], [0, 0, 1, 1], [], []>} : vector<16x32xf32>, vector<32x64xf32>, vector<16x64xf32> -> vector<16x64xf32>
    %22 = vector.extract_strided_slice %2 {offsets = [2, 0, 0], sizes = [1, 64, 64], strides = [1, 1, 1]} : vector<3x64x64xf32> to vector<1x64x64xf32>
    %23 = vector.shape_cast %22 : vector<1x64x64xf32> to vector<64x64xf32>
    %cst_13 = arith.constant dense<0.000000e+00> : vector<16x64xf32>
    %24 = tpu.matmul %21, %23, %cst_13 {dimension_numbers = #tpu.dot_dimension_numbers<[1], [0], [0], [1], [0, 0, 1, 1], [], []>} : vector<16x64xf32>, vector<64x64xf32>, vector<16x64xf32> -> vector<16x64xf32>
    %25 = arith.addf %18, %24 : vector<16x64xf32>
    %cst_14 = arith.constant 0.000000e+00 : f32
    %26 = vector.broadcast %cst_14 : f32 to vector<16x64xf32>
    %27 = arith.maximumf %25, %26 : vector<16x64xf32>
    %c0_15 = arith.constant 0 : index
    %c0_16 = arith.constant 0 : index
    %c0_17 = arith.constant 0 : index
    %28 = vector.load %arg4[%c0_15, %c0_16, %c0_17] : memref<3x8x16xf32, #tpu.memory_space<vmem>>, vector<3x8x16xf32>
    %c0_18 = arith.constant 0 : index
    %c0_19 = arith.constant 0 : index
    %c0_20 = arith.constant 0 : index
    %29 = vector.load %arg5[%c0_18, %c0_19, %c0_20] : memref<3x64x64xf32, #tpu.memory_space<vmem>>, vector<3x64x64xf32>
    %c0_21 = arith.constant 0 : index
    %c0_22 = arith.constant 0 : index
    %30 = vector.load %arg6[%c0_21, %c0_22] : memref<1x64xf32, #tpu.memory_space<vmem>>, vector<1x64xf32>
    %31 = vector.extract_strided_slice %28 {offsets = [0, 0, 0], sizes = [1, 8, 16], strides = [1, 1, 1]} : vector<3x8x16xf32> to vector<1x8x16xf32>
    %32 = vector.shape_cast %31 : vector<1x8x16xf32> to vector<8x16xf32>
    %cst_23 = arith.constant dense<0.000000e+00> : vector<8x64xf32>
    %33 = tpu.matmul %32, %27, %cst_23 {dimension_numbers = #tpu.dot_dimension_numbers<[1], [0], [0], [1], [0, 0, 1, 1], [], []>} : vector<8x16xf32>, vector<16x64xf32>, vector<8x64xf32> -> vector<8x64xf32>
    %34 = vector.extract_strided_slice %29 {offsets = [0, 0, 0], sizes = [1, 64, 64], strides = [1, 1, 1]} : vector<3x64x64xf32> to vector<1x64x64xf32>
    %35 = vector.shape_cast %34 : vector<1x64x64xf32> to vector<64x64xf32>
    %cst_24 = arith.constant dense<0.000000e+00> : vector<8x64xf32>
    %36 = tpu.matmul %33, %35, %cst_24 {dimension_numbers = #tpu.dot_dimension_numbers<[1], [0], [0], [1], [0, 0, 1, 1], [], []>} : vector<8x64xf32>, vector<64x64xf32>, vector<8x64xf32> -> vector<8x64xf32>
    %37 = vector.broadcast %30 : vector<1x64xf32> to vector<8x64xf32>
    %38 = arith.addf %37, %36 : vector<8x64xf32>
    %39 = vector.extract_strided_slice %28 {offsets = [1, 0, 0], sizes = [1, 8, 16], strides = [1, 1, 1]} : vector<3x8x16xf32> to vector<1x8x16xf32>
    %40 = vector.shape_cast %39 : vector<1x8x16xf32> to vector<8x16xf32>
    %cst_25 = arith.constant dense<0.000000e+00> : vector<8x64xf32>
    %41 = tpu.matmul %40, %27, %cst_25 {dimension_numbers = #tpu.dot_dimension_numbers<[1], [0], [0], [1], [0, 0, 1, 1], [], []>} : vector<8x16xf32>, vector<16x64xf32>, vector<8x64xf32> -> vector<8x64xf32>
    %42 = vector.extract_strided_slice %29 {offsets = [1, 0, 0], sizes = [1, 64, 64], strides = [1, 1, 1]} : vector<3x64x64xf32> to vector<1x64x64xf32>
    %43 = vector.shape_cast %42 : vector<1x64x64xf32> to vector<64x64xf32>
    %cst_26 = arith.constant dense<0.000000e+00> : vector<8x64xf32>
    %44 = tpu.matmul %41, %43, %cst_26 {dimension_numbers = #tpu.dot_dimension_numbers<[1], [0], [0], [1], [0, 0, 1, 1], [], []>} : vector<8x64xf32>, vector<64x64xf32>, vector<8x64xf32> -> vector<8x64xf32>
    %45 = arith.addf %38, %44 : vector<8x64xf32>
    %46 = vector.extract_strided_slice %28 {offsets = [2, 0, 0], sizes = [1, 8, 16], strides = [1, 1, 1]} : vector<3x8x16xf32> to vector<1x8x16xf32>
    %47 = vector.shape_cast %46 : vector<1x8x16xf32> to vector<8x16xf32>
    %cst_27 = arith.constant dense<0.000000e+00> : vector<8x64xf32>
    %48 = tpu.matmul %47, %27, %cst_27 {dimension_numbers = #tpu.dot_dimension_numbers<[1], [0], [0], [1], [0, 0, 1, 1], [], []>} : vector<8x16xf32>, vector<16x64xf32>, vector<8x64xf32> -> vector<8x64xf32>
    %49 = vector.extract_strided_slice %29 {offsets = [2, 0, 0], sizes = [1, 64, 64], strides = [1, 1, 1]} : vector<3x64x64xf32> to vector<1x64x64xf32>
    %50 = vector.shape_cast %49 : vector<1x64x64xf32> to vector<64x64xf32>
    %cst_28 = arith.constant dense<0.000000e+00> : vector<8x64xf32>
    %51 = tpu.matmul %48, %50, %cst_28 {dimension_numbers = #tpu.dot_dimension_numbers<[1], [0], [0], [1], [0, 0, 1, 1], [], []>} : vector<8x64xf32>, vector<64x64xf32>, vector<8x64xf32> -> vector<8x64xf32>
    %52 = arith.addf %45, %51 : vector<8x64xf32>
    %c0_29 = arith.constant 0 : index
    %c0_30 = arith.constant 0 : index
    %53 = vector.load %arg7[%c0_29, %c0_30] : memref<64x64xf32, #tpu.memory_space<vmem>>, vector<64x64xf32>
    %cst_31 = arith.constant dense<0.000000e+00> : vector<64xf32>
    %54 = vector.multi_reduction <add>, %52, %cst_31 [0] : vector<8x64xf32> to vector<64xf32>
    %55 = vector.shape_cast %54 : vector<64xf32> to vector<1x64xf32>
    %cst_32 = arith.constant 8.000000e+00 : f32
    %56 = vector.broadcast %cst_32 : f32 to vector<1x64xf32>
    %57 = arith.divf %55, %56 : vector<1x64xf32>
    %cst_33 = arith.constant dense<0.000000e+00> : vector<1x64xf32>
    %58 = tpu.matmul %57, %53, %cst_33 {dimension_numbers = #tpu.dot_dimension_numbers<[1], [0], [0], [1], [0, 0, 1, 1], [], []>} : vector<1x64xf32>, vector<64x64xf32>, vector<1x64xf32> -> vector<1x64xf32>
    %59 = vector.broadcast %58 : vector<1x64xf32> to vector<8x64xf32>
    %60 = arith.subf %52, %59 : vector<8x64xf32>
    %61 = arith.mulf %60, %60 : vector<8x64xf32>
    %cst_34 = arith.constant dense<0.000000e+00> : vector<64xf32>
    %62 = vector.multi_reduction <add>, %61, %cst_34 [0] : vector<8x64xf32> to vector<64xf32>
    %63 = vector.shape_cast %62 : vector<64xf32> to vector<1x64xf32>
    %cst_35 = arith.constant 8.000000e+00 : f32
    %64 = vector.broadcast %cst_35 : f32 to vector<1x64xf32>
    %65 = arith.divf %63, %64 : vector<1x64xf32>
    %cst_36 = arith.constant dense<0.000000e+00> : vector<1x64xf32>
    %66 = tpu.matmul %65, %53, %cst_36 {dimension_numbers = #tpu.dot_dimension_numbers<[1], [0], [0], [1], [0, 0, 1, 1], [], []>} : vector<1x64xf32>, vector<64x64xf32>, vector<1x64xf32> -> vector<1x64xf32>
    %67 = vector.broadcast %58 : vector<1x64xf32> to vector<8x64xf32>
    %68 = arith.subf %52, %67 : vector<8x64xf32>
    %cst_37 = arith.constant 9.99999974E-6 : f32
    %69 = vector.broadcast %cst_37 : f32 to vector<1x64xf32>
    %70 = arith.addf %66, %69 : vector<1x64xf32>
    %71 = math.rsqrt %70 : vector<1x64xf32>
    %72 = vector.broadcast %71 : vector<1x64xf32> to vector<8x64xf32>
    %73 = arith.mulf %68, %72 : vector<8x64xf32>
    %c0_38 = arith.constant 0 : index
    %c0_39 = arith.constant 0 : index
    %74 = vector.load %arg8[%c0_38, %c0_39] : memref<1x64xf32, #tpu.memory_space<vmem>>, vector<1x64xf32>
    %75 = vector.broadcast %74 : vector<1x64xf32> to vector<8x64xf32>
    %76 = arith.mulf %73, %75 : vector<8x64xf32>
    %c0_40 = arith.constant 0 : index
    %c0_41 = arith.constant 0 : index
    %77 = vector.load %arg9[%c0_40, %c0_41] : memref<1x64xf32, #tpu.memory_space<vmem>>, vector<1x64xf32>
    %78 = vector.broadcast %77 : vector<1x64xf32> to vector<8x64xf32>
    %79 = arith.addf %76, %78 : vector<8x64xf32>
    %cst_42 = arith.constant 0.000000e+00 : f32
    %80 = vector.broadcast %cst_42 : f32 to vector<8x64xf32>
    %81 = arith.maximumf %79, %80 : vector<8x64xf32>
    %c0_43 = arith.constant 0 : index
    %c0_44 = arith.constant 0 : index
    %c0_45 = arith.constant 0 : index
    %82 = vector.load %arg10[%c0_43, %c0_44, %c0_45] : memref<3x2x8xf32, #tpu.memory_space<vmem>>, vector<3x2x8xf32>
    %c0_46 = arith.constant 0 : index
    %c0_47 = arith.constant 0 : index
    %c0_48 = arith.constant 0 : index
    %83 = vector.load %arg11[%c0_46, %c0_47, %c0_48] : memref<3x64x32xf32, #tpu.memory_space<vmem>>, vector<3x64x32xf32>
    %c0_49 = arith.constant 0 : index
    %c0_50 = arith.constant 0 : index
    %84 = vector.load %arg12[%c0_49, %c0_50] : memref<1x32xf32, #tpu.memory_space<vmem>>, vector<1x32xf32>
    %85 = vector.extract_strided_slice %82 {offsets = [0, 0, 0], sizes = [1, 2, 8], strides = [1, 1, 1]} : vector<3x2x8xf32> to vector<1x2x8xf32>
    %86 = vector.shape_cast %85 : vector<1x2x8xf32> to vector<2x8xf32>
    %cst_51 = arith.constant dense<0.000000e+00> : vector<2x64xf32>
    %87 = tpu.matmul %86, %81, %cst_51 {dimension_numbers = #tpu.dot_dimension_numbers<[1], [0], [0], [1], [0, 0, 1, 1], [], []>} : vector<2x8xf32>, vector<8x64xf32>, vector<2x64xf32> -> vector<2x64xf32>
    %88 = vector.extract_strided_slice %83 {offsets = [0, 0, 0], sizes = [1, 64, 32], strides = [1, 1, 1]} : vector<3x64x32xf32> to vector<1x64x32xf32>
    %89 = vector.shape_cast %88 : vector<1x64x32xf32> to vector<64x32xf32>
    %cst_52 = arith.constant dense<0.000000e+00> : vector<2x32xf32>
    %90 = tpu.matmul %87, %89, %cst_52 {dimension_numbers = #tpu.dot_dimension_numbers<[1], [0], [0], [1], [0, 0, 1, 1], [], []>} : vector<2x64xf32>, vector<64x32xf32>, vector<2x32xf32> -> vector<2x32xf32>
    %91 = vector.broadcast %84 : vector<1x32xf32> to vector<2x32xf32>
    %92 = arith.addf %91, %90 : vector<2x32xf32>
    %93 = vector.extract_strided_slice %82 {offsets = [1, 0, 0], sizes = [1, 2, 8], strides = [1, 1, 1]} : vector<3x2x8xf32> to vector<1x2x8xf32>
    %94 = vector.shape_cast %93 : vector<1x2x8xf32> to vector<2x8xf32>
    %cst_53 = arith.constant dense<0.000000e+00> : vector<2x64xf32>
    %95 = tpu.matmul %94, %81, %cst_53 {dimension_numbers = #tpu.dot_dimension_numbers<[1], [0], [0], [1], [0, 0, 1, 1], [], []>} : vector<2x8xf32>, vector<8x64xf32>, vector<2x64xf32> -> vector<2x64xf32>
    %96 = vector.extract_strided_slice %83 {offsets = [1, 0, 0], sizes = [1, 64, 32], strides = [1, 1, 1]} : vector<3x64x32xf32> to vector<1x64x32xf32>
    %97 = vector.shape_cast %96 : vector<1x64x32xf32> to vector<64x32xf32>
    %cst_54 = arith.constant dense<0.000000e+00> : vector<2x32xf32>
    %98 = tpu.matmul %95, %97, %cst_54 {dimension_numbers = #tpu.dot_dimension_numbers<[1], [0], [0], [1], [0, 0, 1, 1], [], []>} : vector<2x64xf32>, vector<64x32xf32>, vector<2x32xf32> -> vector<2x32xf32>
    %99 = arith.addf %92, %98 : vector<2x32xf32>
    %100 = vector.extract_strided_slice %82 {offsets = [2, 0, 0], sizes = [1, 2, 8], strides = [1, 1, 1]} : vector<3x2x8xf32> to vector<1x2x8xf32>
    %101 = vector.shape_cast %100 : vector<1x2x8xf32> to vector<2x8xf32>
    %cst_55 = arith.constant dense<0.000000e+00> : vector<2x64xf32>
    %102 = tpu.matmul %101, %81, %cst_55 {dimension_numbers = #tpu.dot_dimension_numbers<[1], [0], [0], [1], [0, 0, 1, 1], [], []>} : vector<2x8xf32>, vector<8x64xf32>, vector<2x64xf32> -> vector<2x64xf32>
    %103 = vector.extract_strided_slice %83 {offsets = [2, 0, 0], sizes = [1, 64, 32], strides = [1, 1, 1]} : vector<3x64x32xf32> to vector<1x64x32xf32>
    %104 = vector.shape_cast %103 : vector<1x64x32xf32> to vector<64x32xf32>
    %cst_56 = arith.constant dense<0.000000e+00> : vector<2x32xf32>
    %105 = tpu.matmul %102, %104, %cst_56 {dimension_numbers = #tpu.dot_dimension_numbers<[1], [0], [0], [1], [0, 0, 1, 1], [], []>} : vector<2x64xf32>, vector<64x32xf32>, vector<2x32xf32> -> vector<2x32xf32>
    %106 = arith.addf %99, %105 : vector<2x32xf32>
    %cst_57 = arith.constant 0.000000e+00 : f32
    %107 = vector.broadcast %cst_57 : f32 to vector<2x32xf32>
    %108 = arith.maximumf %106, %107 : vector<2x32xf32>
    %c0_58 = arith.constant 0 : index
    %c0_59 = arith.constant 0 : index
    %c0_60 = arith.constant 0 : index
    %109 = vector.load %arg13[%c0_58, %c0_59, %c0_60] : memref<1x2x2xf32, #tpu.memory_space<vmem>>, vector<1x2x2xf32>
    %c0_61 = arith.constant 0 : index
    %c0_62 = arith.constant 0 : index
    %c0_63 = arith.constant 0 : index
    %110 = vector.load %arg14[%c0_61, %c0_62, %c0_63] : memref<1x32x128xf32, #tpu.memory_space<vmem>>, vector<1x32x128xf32>
    %c0_64 = arith.constant 0 : index
    %c0_65 = arith.constant 0 : index
    %111 = vector.load %arg15[%c0_64, %c0_65] : memref<1x128xf32, #tpu.memory_space<vmem>>, vector<1x128xf32>
    %112 = vector.shape_cast %109 : vector<1x2x2xf32> to vector<2x2xf32>
    %cst_66 = arith.constant dense<0.000000e+00> : vector<2x32xf32>
    %113 = tpu.matmul %112, %108, %cst_66 {dimension_numbers = #tpu.dot_dimension_numbers<[1], [0], [0], [1], [0, 0, 1, 1], [], []>} : vector<2x2xf32>, vector<2x32xf32>, vector<2x32xf32> -> vector<2x32xf32>
    %114 = vector.shape_cast %110 : vector<1x32x128xf32> to vector<32x128xf32>
    %cst_67 = arith.constant dense<0.000000e+00> : vector<2x128xf32>
    %115 = tpu.matmul %113, %114, %cst_67 {dimension_numbers = #tpu.dot_dimension_numbers<[1], [0], [0], [1], [0, 0, 1, 1], [], []>} : vector<2x32xf32>, vector<32x128xf32>, vector<2x128xf32> -> vector<2x128xf32>
    %116 = vector.broadcast %111 : vector<1x128xf32> to vector<2x128xf32>
    %117 = arith.addf %116, %115 : vector<2x128xf32>
    %cst_68 = arith.constant 0.000000e+00 : f32
    %118 = vector.broadcast %cst_68 : f32 to vector<2x128xf32>
    %119 = arith.maximumf %117, %118 : vector<2x128xf32>
    %c0_69 = arith.constant 0 : index
    %c0_70 = arith.constant 0 : index
    %120 = vector.load %arg16[%c0_69, %c0_70] : memref<128x8xf32, #tpu.memory_space<vmem>>, vector<128x8xf32>
    %cst_71 = arith.constant dense<0.000000e+00> : vector<2x8xf32>
    %121 = tpu.matmul %119, %120, %cst_71 {dimension_numbers = #tpu.dot_dimension_numbers<[1], [0], [0], [1], [0, 0, 1, 1], [], []>} : vector<2x128xf32>, vector<128x8xf32>, vector<2x8xf32> -> vector<2x8xf32>
    %c0_72 = arith.constant 0 : index
    %c0_73 = arith.constant 0 : index
    %122 = vector.load %arg17[%c0_72, %c0_73] : memref<1x8xf32, #tpu.memory_space<vmem>>, vector<1x8xf32>
    %123 = vector.broadcast %122 : vector<1x8xf32> to vector<2x8xf32>
    %124 = arith.addf %121, %123 : vector<2x8xf32>
    %c0_74 = arith.constant 0 : index
    %c0_75 = arith.constant 0 : index
    %125 = vector.load %arg18[%c0_74, %c0_75] : memref<2x8xf32, #tpu.memory_space<vmem>>, vector<2x8xf32>
    tpu.vector_store %arg18[%c0_74, %c0_75], %124 {strides = array<i32>} : memref<2x8xf32, #tpu.memory_space<vmem>>, vector<2x8xf32>,
    return
  }
}

</mosaic_0001>

<llo_original>
// kernel: encoder_forward.1
$region0: #{encoder_forward.1}
  #allocation0 [shape = 'u32[]', space=smem, size = 0x4, offset = 0x4, fixed_abs, tag = 'smem constant byte address 0x4 - core index']
  #allocation1 [shape = 'u32[144,128]{1,0:T(1,128)}', space=vmem, size = 0x12000, scoped, tag = 'internal scratch']
  %s0 = inlined_call_operand.vmem [shape: f32[32,64], index: 0, kind: input, shape index: {}]
  %s1 = inlined_call_operand.vmem [shape: f32[3,16,32], index: 1, kind: input, shape index: {}]
  %s2 = inlined_call_operand.vmem [shape: f32[3,64,64], index: 2, kind: input, shape index: {}]
  %s3 = inlined_call_operand.vmem [shape: f32[1,64], index: 3, kind: input, shape index: {}]
  %s4 = inlined_call_operand.vmem [shape: f32[3,8,16], index: 4, kind: input, shape index: {}]
  %s5 = inlined_call_operand.vmem [shape: f32[3,64,64], index: 5, kind: input, shape index: {}]
  %s6 = inlined_call_operand.vmem [shape: f32[1,64], index: 6, kind: input, shape index: {}]
  %s7 = inlined_call_operand.vmem [shape: f32[64,64], index: 7, kind: input, shape index: {}]
  %s8 = inlined_call_operand.vmem [shape: f32[1,64], index: 8, kind: input, shape index: {}]
  %s9 = inlined_call_operand.vmem [shape: f32[1,64], index: 9, kind: input, shape index: {}]
  %s10 = inlined_call_operand.vmem [shape: f32[3,2,8], index: 10, kind: input, shape index: {}]
  %s11 = inlined_call_operand.vmem [shape: f32[3,64,32], index: 11, kind: input, shape index: {}]
  %s12 = inlined_call_operand.vmem [shape: f32[1,32], index: 12, kind: input, shape index: {}]
  %s13 = inlined_call_operand.vmem [shape: f32[1,2,2], index: 13, kind: input, shape index: {}]
  %s14 = inlined_call_operand.vmem [shape: f32[1,32,128], index: 14, kind: input, shape index: {}]
  %s15 = inlined_call_operand.vmem [shape: f32[1,128], index: 15, kind: input, shape index: {}]
  %s16 = inlined_call_operand.vmem [shape: f32[128,8], index: 16, kind: input, shape index: {}]
  %s17 = inlined_call_operand.vmem [shape: f32[1,8], index: 17, kind: input, shape index: {}]
  %s18 = inlined_call_operand.hbm [shape: f32[2,8], index: 18, kind: output, shape index: {}]
  %s19 = sld [smem:[#allocation0]]
  $region82: #{encoder_forward.1} parent=0
    _
  %s21 = ssub.s32 1, %s19
  %s22 = scalar_select 0, %s21, %s19
  $region1: #{encoder_forward.1} parent=0
    #allocation2 [shape = 'u8[1024]{0}', space=vmem, size = 0x400, scoped, tag = 'output window, operand 0, single buffered']
    #allocation3 [shape = 's32[1]{0}', space=sflag, size = 0x4, scoped, tag = 'scoped memory for encoder_forward.1']
    %23 = vsyncpa [#allocation3], 0
    // Predicated region
    $region2: #{encoder_forward.1} parent=1 // pred_check
      _
    $region3: #{encoder_forward.1} parent=1 // pred_check_branch
      %25 = sbr.rel (0) target = $region5
    $region4: #{encoder_forward.1} parent=1 // pred_region
      _
    $region5: #{encoder_forward.1} parent=1 // pred_fallthru
      _
    // Predicated region
    $region6: #{encoder_forward.1} parent=1 // pred_check
      _
    $region7: #{encoder_forward.1} parent=1 // pred_check_branch
      %27 = sbr.rel (0) target = $region9
    $region8: #{encoder_forward.1} parent=1 // pred_region
      _
    $region9: #{encoder_forward.1} parent=1 // pred_fallthru
      _
    // Predicated region
    $region10: #{encoder_forward.1} parent=1 // pred_check
      _
    $region11: #{encoder_forward.1} parent=1 // pred_check_branch
      %29 = sbr.rel (0) target = $region13
    $region12: #{encoder_forward.1} parent=1 // pred_region
      _
    $region13: #{encoder_forward.1} parent=1 // pred_fallthru
      _
    // Predicated region
    $region14: #{encoder_forward.1} parent=1 // pred_check
      _
    $region15: #{encoder_forward.1} parent=1 // pred_check_branch
      %31 = sbr.rel (0) target = $region17
    $region16: #{encoder_forward.1} parent=1 // pred_region
      _
    $region17: #{encoder_forward.1} parent=1 // pred_fallthru
      _
    // Predicated region
    $region18: #{encoder_forward.1} parent=1 // pred_check
      _
    $region19: #{encoder_forward.1} parent=1 // pred_check_branch
      %33 = sbr.rel (0) target = $region21
    $region20: #{encoder_forward.1} parent=1 // pred_region
      _
    $region21: #{encoder_forward.1} parent=1 // pred_fallthru
      _
    // Predicated region
    $region22: #{encoder_forward.1} parent=1 // pred_check
      _
    $region23: #{encoder_forward.1} parent=1 // pred_check_branch
      %35 = sbr.rel (0) target = $region25
    $region24: #{encoder_forward.1} parent=1 // pred_region
      _
    $region25: #{encoder_forward.1} parent=1 // pred_fallthru
      _
    // Predicated region
    $region26: #{encoder_forward.1} parent=1 // pred_check
      _
    $region27: #{encoder_forward.1} parent=1 // pred_check_branch
      %37 = sbr.rel (0) target = $region29
    $region28: #{encoder_forward.1} parent=1 // pred_region
      _
    $region29: #{encoder_forward.1} parent=1 // pred_fallthru
      _
    // Predicated region
    $region30: #{encoder_forward.1} parent=1 // pred_check
      _
    $region31: #{encoder_forward.1} parent=1 // pred_check_branch
      %39 = sbr.rel (0) target = $region33
    $region32: #{encoder_forward.1} parent=1 // pred_region
      _
    $region33: #{encoder_forward.1} parent=1 // pred_fallthru
      _
    // Predicated region
    $region34: #{encoder_forward.1} parent=1 // pred_check
      _
    $region35: #{encoder_forward.1} parent=1 // pred_check_branch
      %41 = sbr.rel (0) target = $region37
    $region36: #{encoder_forward.1} parent=1 // pred_region
      _
    $region37: #{encoder_forward.1} parent=1 // pred_fallthru
      _
    // Predicated region
    $region38: #{encoder_forward.1} parent=1 // pred_check
      _
    $region39: #{encoder_forward.1} parent=1 // pred_check_branch
      %43 = sbr.rel (0) target = $region41
    $region40: #{encoder_forward.1} parent=1 // pred_region
      _
    $region41: #{encoder_forward.1} parent=1 // pred_fallthru
      _
    // Predicated region
    $region42: #{encoder_forward.1} parent=1 // pred_check
      _
    $region43: #{encoder_forward.1} parent=1 // pred_check_branch
      %45 = sbr.rel (0) target = $region45
    $region44: #{encoder_forward.1} parent=1 // pred_region
      _
    $region45: #{encoder_forward.1} parent=1 // pred_fallthru
      _
    // Predicated region
    $region46: #{encoder_forward.1} parent=1 // pred_check
      _
    $region47: #{encoder_forward.1} parent=1 // pred_check_branch
      %47 = sbr.rel (0) target = $region49
    $region48: #{encoder_forward.1} parent=1 // pred_region
      _
    $region49: #{encoder_forward.1} parent=1 // pred_fallthru
      _
    // Predicated region
    $region50: #{encoder_forward.1} parent=1 // pred_check
      _
    $region51: #{encoder_forward.1} parent=1 // pred_check_branch
      %49 = sbr.rel (0) target = $region53
    $region52: #{encoder_forward.1} parent=1 // pred_region
      _
    $region53: #{encoder_forward.1} parent=1 // pred_fallthru
      _
    // Predicated region
    $region54: #{encoder_forward.1} parent=1 // pred_check
      _
    $region55: #{encoder_forward.1} parent=1 // pred_check_branch
      %51 = sbr.rel (0) target = $region57
    $region56: #{encoder_forward.1} parent=1 // pred_region
      _
    $region57: #{encoder_forward.1} parent=1 // pred_fallthru
      _
    // Predicated region
    $region58: #{encoder_forward.1} parent=1 // pred_check
      _
    $region59: #{encoder_forward.1} parent=1 // pred_check_branch
      %53 = sbr.rel (0) target = $region61
    $region60: #{encoder_forward.1} parent=1 // pred_region
      _
    $region61: #{encoder_forward.1} parent=1 // pred_fallthru
      _
    // Predicated region
    $region62: #{encoder_forward.1} parent=1 // pred_check
      _
    $region63: #{encoder_forward.1} parent=1 // pred_check_branch
      %55 = sbr.rel (0) target = $region65
    $region64: #{encoder_forward.1} parent=1 // pred_region
      _
    $region65: #{encoder_forward.1} parent=1 // pred_fallthru
      _
    // Predicated region
    $region66: #{encoder_forward.1} parent=1 // pred_check
      _
    $region67: #{encoder_forward.1} parent=1 // pred_check_branch
      %57 = sbr.rel (0) target = $region69
    $region68: #{encoder_forward.1} parent=1 // pred_region
      _
    $region69: #{encoder_forward.1} parent=1 // pred_fallthru
      _
    // Predicated region
    $region70: #{encoder_forward.1} parent=1 // pred_check
      _
    $region71: #{encoder_forward.1} parent=1 // pred_check_branch
      %59 = sbr.rel (0) target = $region73
    $region72: #{encoder_forward.1} parent=1 // pred_region
      _
    $region73: #{encoder_forward.1} parent=1 // pred_fallthru
      _
    %v60 = vld [vmem:[%s0] sm:$0xff]
    %v61 = vld [vmem:[%s0 + $0x8] sm:$0xff]
    %v62 = vld [vmem:[%s0 + $0x10] sm:$0xff]
    %v63 = vld [vmem:[%s0 + $0x18] sm:$0xff]
    %v64 = vld [vmem:[%s1] sm:$0xff]
    %v65 = vld [vmem:[%s1 + $0x8] sm:$0xff]
    %v66 = vld [vmem:[%s1 + $0x10] sm:$0xff]
    %v67 = vld [vmem:[%s1 + $0x18] sm:$0xff]
    %v68 = vld [vmem:[%s1 + $0x20] sm:$0xff]
    %v69 = vld [vmem:[%s1 + $0x28] sm:$0xff]
    %v70 = vld [vmem:[%s2] sm:$0xff]
    %v71 = vld [vmem:[%s2 + $0x8] sm:$0xff]
    %v72 = vld [vmem:[%s2 + $0x10] sm:$0xff]
    %v73 = vld [vmem:[%s2 + $0x18] sm:$0xff]
    %v74 = vld [vmem:[%s2 + $0x20] sm:$0xff]
    %v75 = vld [vmem:[%s2 + $0x28] sm:$0xff]
    %v76 = vld [vmem:[%s2 + $0x30] sm:$0xff]
    %v77 = vld [vmem:[%s2 + $0x38] sm:$0xff]
    %v78 = vld [vmem:[%s2 + $0x40] sm:$0xff]
    %v79 = vld [vmem:[%s2 + $0x48] sm:$0xff]
    %v80 = vld [vmem:[%s2 + $0x50] sm:$0xff]
    %v81 = vld [vmem:[%s2 + $0x58] sm:$0xff]
    %v82 = vld [vmem:[%s2 + $0x60] sm:$0xff]
    %v83 = vld [vmem:[%s2 + $0x68] sm:$0xff]
    %v84 = vld [vmem:[%s2 + $0x70] sm:$0xff]
    %v85 = vld [vmem:[%s2 + $0x78] sm:$0xff]
    %v86 = vld [vmem:[%s2 + $0x80] sm:$0xff]
    %v87 = vld [vmem:[%s2 + $0x88] sm:$0xff]
    %v88 = vld [vmem:[%s2 + $0x90] sm:$0xff]
    %v89 = vld [vmem:[%s2 + $0x98] sm:$0xff]
    %v90 = vld [vmem:[%s2 + $0xa0] sm:$0xff]
    %v91 = vld [vmem:[%s2 + $0xa8] sm:$0xff]
    %v92 = vld [vmem:[%s2 + $0xb0] sm:$0xff]
    %v93 = vld [vmem:[%s2 + $0xb8] sm:$0xff]
    %v94 = vld [vmem:[%s3] sm:$0x1]
    %vm95 = vcmask 261120
    %v97 = vsel %vm95, %v64, 0
    %v100 = vsel %vm95, %v65, 0
    %102 = vmatprep.subr.mxu0 0.0
    %103 = vmatpush1.msra.mxu0 %v60
    %104 = vmatprep.subr.mxu0 0.0
    %105 = vmatpush1.msra.mxu0 %v61
    %106 = vmatprep.subr.mxu0 0.0
    %107 = vmatpush1.msra.mxu0 %v62
    %108 = vmatprep.subr.mxu0 0.0
    %109 = vmatpush1.msra.mxu0 %v63
    %110 = vmatprep.subr.mxu0 0.0
    %111 = vmatpush1.msra.mxu0 0.0
    %112 = vmatprep.subr.mxu0 0.0
    %113 = vmatpush1.msra.mxu0 0.0
    %114 = vmatprep.subr.mxu0 0.0
    %115 = vmatpush1.msra.mxu0 0.0
    %116 = vmatprep.subr.mxu0 0.0
    %117 = vmatpush1.msra.mxu0 0.0
    %118 = vmatprep.subr.mxu0 0.0
    %119 = vmatpush1.msra.mxu0 0.0
    %120 = vmatprep.subr.mxu0 0.0
    %121 = vmatpush1.msra.mxu0 0.0
    %122 = vmatprep.subr.mxu0 0.0
    %123 = vmatpush1.msra.mxu0 0.0
    %124 = vmatprep.subr.mxu0 0.0
    %125 = vmatpush1.msra.mxu0 0.0
    %126 = vmatprep.subr.mxu0 0.0
    %127 = vmatpush1.msra.mxu0 0.0
    %128 = vmatprep.subr.mxu0 0.0
    %129 = vmatpush1.msra.mxu0 0.0
    %130 = vmatprep.subr.mxu0 0.0
    %131 = vmatpush1.msra.mxu0 0.0
    %132 = vmatprep.subr.mxu0 0.0
    %133 = vmatpush1.msra.mxu0 0.0
    %134 = vmatprep.subr.mxu0 0.0
    %135 = vmatpush1.msra.mxu0 0.0
    %136 = vmatprep.subr.mxu0 0.0
    %137 = vmatpush1.msra.mxu0 0.0
    %138 = vmatprep.subr.mxu0 0.0
    %139 = vmatpush1.msra.mxu0 0.0
    %140 = vmatprep.subr.mxu0 0.0
    %141 = vmatpush1.msra.mxu0 0.0
    %142 = vmatprep.subr.mxu0 0.0
    %143 = vmatpush1.msra.mxu0 0.0
    %144 = vmatprep.subr.mxu0 0.0
    %145 = vmatpush1.msra.mxu0 0.0
    %146 = vmatprep.subr.mxu0 0.0
    %147 = vmatpush1.msra.mxu0 0.0
    %148 = vmatprep.subr.mxu0 0.0
    %149 = vmatpush1.msra.mxu0 0.0
    %150 = vmatprep.subr.mxu0 0.0
    %151 = vmatpush1.msra.mxu0 0.0
    %152 = vmatprep.subr.mxu0 0.0
    %153 = vmatpush1.msra.mxu0 0.0
    %154 = vmatprep.subr.mxu0 0.0
    %155 = vmatpush1.msra.mxu0 0.0
    %156 = vmatprep.subr.mxu0 0.0
    %157 = vmatpush1.msra.mxu0 0.0
    %158 = vmatprep.subr.mxu0 0.0
    %159 = vmatpush1.msra.mxu0 0.0
    %160 = vmatprep.subr.mxu0 0.0
    %161 = vmatpush1.msra.mxu0 0.0
    %162 = vmatprep.subr.mxu0 0.0
    %163 = vmatpush1.msra.mxu0 0.0
    %164 = vmatprep.subr.mxu0 0.0
    %165 = vmatpush1.msra.mxu0 0.0
    %166 = vmatprep.mubr.f32.mxu0 0.0
    %167 = vmatmul.mubr.f32.gmra.mrb[0].mxu0 %v97
    %v168 = vpop.f32.mrb[0].mxu0
    %v169 = vadd.f32 0.0, %v168
    %v170 = vpop.f32.mrb[0].mxu0
    %171 = vmatprep.mubr.f32.mxu0 0.0
    %172 = vmatmul.mubr.f32.gmra.mrb[0].mxu0 %v100
    %v173 = vpop.f32.mrb[0].mxu0
    %v174 = vadd.f32 0.0, %v173
    %v175 = vpop.f32.mrb[0].mxu0
    %176 = vdwg.mxu0
    %vm177 = vcmask 523264
    %v179 = vsel %vm177, %v169, 0
    %v182 = vsel %vm177, %v174, 0
    %184 = vmatprep.subr.mxu0 0.0
    %185 = vmatpush1.msra.mxu0 %v70
    %186 = vmatprep.subr.mxu0 0.0
    %187 = vmatpush1.msra.mxu0 %v71
    %188 = vmatprep.subr.mxu0 0.0
    %189 = vmatpush1.msra.mxu0 %v72
    %190 = vmatprep.subr.mxu0 0.0
    %191 = vmatpush1.msra.mxu0 %v73
    %192 = vmatprep.subr.mxu0 0.0
    %193 = vmatpush1.msra.mxu0 %v74
    %194 = vmatprep.subr.mxu0 0.0
    %195 = vmatpush1.msra.mxu0 %v75
    %196 = vmatprep.subr.mxu0 0.0
    %197 = vmatpush1.msra.mxu0 %v76
    %198 = vmatprep.subr.mxu0 0.0
    %199 = vmatpush1.msra.mxu0 %v77
    %200 = vmatprep.subr.mxu0 0.0
    %201 = vmatpush1.msra.mxu0 0.0
    %202 = vmatprep.subr.mxu0 0.0
    %203 = vmatpush1.msra.mxu0 0.0
    %204 = vmatprep.subr.mxu0 0.0
    %205 = vmatpush1.msra.mxu0 0.0
    %206 = vmatprep.subr.mxu0 0.0
    %207 = vmatpush1.msra.mxu0 0.0
    %208 = vmatprep.subr.mxu0 0.0
    %209 = vmatpush1.msra.mxu0 0.0
    %210 = vmatprep.subr.mxu0 0.0
    %211 = vmatpush1.msra.mxu0 0.0
    %212 = vmatprep.subr.mxu0 0.0
    %213 = vmatpush1.msra.mxu0 0.0
    %214 = vmatprep.subr.mxu0 0.0
    %215 = vmatpush1.msra.mxu0 0.0
    %216 = vmatprep.subr.mxu0 0.0
    %217 = vmatpush1.msra.mxu0 0.0
    %218 = vmatprep.subr.mxu0 0.0
    %219 = vmatpush1.msra.mxu0 0.0
    %220 = vmatprep.subr.mxu0 0.0
    %221 = vmatpush1.msra.mxu0 0.0
    %222 = vmatprep.subr.mxu0 0.0
    %223 = vmatpush1.msra.mxu0 0.0
    %224 = vmatprep.subr.mxu0 0.0
    %225 = vmatpush1.msra.mxu0 0.0
    %226 = vmatprep.subr.mxu0 0.0
    %227 = vmatpush1.msra.mxu0 0.0
    %228 = vmatprep.subr.mxu0 0.0
    %229 = vmatpush1.msra.mxu0 0.0
    %230 = vmatprep.subr.mxu0 0.0
    %231 = vmatpush1.msra.mxu0 0.0
    %232 = vmatprep.subr.mxu0 0.0
    %233 = vmatpush1.msra.mxu0 0.0
    %234 = vmatprep.subr.mxu0 0.0
    %235 = vmatpush1.msra.mxu0 0.0
    %236 = vmatprep.subr.mxu0 0.0
    %237 = vmatpush1.msra.mxu0 0.0
    %238 = vmatprep.subr.mxu0 0.0
    %239 = vmatpush1.msra.mxu0 0.0
    %240 = vmatprep.subr.mxu0 0.0
    %241 = vmatpush1.msra.mxu0 0.0
    %242 = vmatprep.subr.mxu0 0.0
    %243 = vmatpush1.msra.mxu0 0.0
    %244 = vmatprep.subr.mxu0 0.0
    %245 = vmatpush1.msra.mxu0 0.0
    %246 = vmatprep.subr.mxu0 0.0
    %247 = vmatpush1.msra.mxu0 0.0
    %248 = vmatprep.mubr.f32.mxu0 0.0
    %249 = vmatmul.mubr.f32.gmra.mrb[0].mxu0 %v179
    %v250 = vpop.f32.mrb[0].mxu0
    %v251 = vadd.f32 0.0, %v250
    %v252 = vpop.f32.mrb[0].mxu0
    %253 = vmatprep.mubr.f32.mxu0 0.0
    %254 = vmatmul.mubr.f32.gmra.mrb[0].mxu0 %v182
    %v255 = vpop.f32.mrb[0].mxu0
    %v256 = vadd.f32 0.0, %v255
    %v257 = vpop.f32.mrb[0].mxu0
    %258 = vdwg.mxu0
    %v260 = vlaneseq
    %v261 = vshrl.u32 %v260, 7
    %v262 = vsub.s32 0, %v261
    %v263 = vrot.slane %v94, %v262
    %v265 = vadd.f32 %v263, %v251
    %v266 = vadd.f32 %v263, %v256
    %v268 = vsel %vm95, %v66, 0
    %v271 = vsel %vm95, %v67, 0
    %273 = vmatprep.subr.mxu0 0.0
    %274 = vmatpush1.msra.mxu0 %v60
    %275 = vmatprep.subr.mxu0 0.0
    %276 = vmatpush1.msra.mxu0 %v61
    %277 = vmatprep.subr.mxu0 0.0
    %278 = vmatpush1.msra.mxu0 %v62
    %279 = vmatprep.subr.mxu0 0.0
    %280 = vmatpush1.msra.mxu0 %v63
    %281 = vmatprep.subr.mxu0 0.0
    %282 = vmatpush1.msra.mxu0 0.0
    %283 = vmatprep.subr.mxu0 0.0
    %284 = vmatpush1.msra.mxu0 0.0
    %285 = vmatprep.subr.mxu0 0.0
    %286 = vmatpush1.msra.mxu0 0.0
    %287 = vmatprep.subr.mxu0 0.0
    %288 = vmatpush1.msra.mxu0 0.0
    %289 = vmatprep.subr.mxu0 0.0
    %290 = vmatpush1.msra.mxu0 0.0
    %291 = vmatprep.subr.mxu0 0.0
    %292 = vmatpush1.msra.mxu0 0.0
    %293 = vmatprep.subr.mxu0 0.0
    %294 = vmatpush1.msra.mxu0 0.0
    %295 = vmatprep.subr.mxu0 0.0
    %296 = vmatpush1.msra.mxu0 0.0
    %297 = vmatprep.subr.mxu0 0.0
    %298 = vmatpush1.msra.mxu0 0.0
    %299 = vmatprep.subr.mxu0 0.0
    %300 = vmatpush1.msra.mxu0 0.0
    %301 = vmatprep.subr.mxu0 0.0
    %302 = vmatpush1.msra.mxu0 0.0
    %303 = vmatprep.subr.mxu0 0.0
    %304 = vmatpush1.msra.mxu0 0.0
    %305 = vmatprep.subr.mxu0 0.0
    %306 = vmatpush1.msra.mxu0 0.0
    %307 = vmatprep.subr.mxu0 0.0
    %308 = vmatpush1.msra.mxu0 0.0
    %309 = vmatprep.subr.mxu0 0.0
    %310 = vmatpush1.msra.mxu0 0.0
    %311 = vmatprep.subr.mxu0 0.0
    %312 = vmatpush1.msra.mxu0 0.0
    %313 = vmatprep.subr.mxu0 0.0
    %314 = vmatpush1.msra.mxu0 0.0
    %315 = vmatprep.subr.mxu0 0.0
    %316 = vmatpush1.msra.mxu0 0.0
    %317 = vmatprep.subr.mxu0 0.0
    %318 = vmatpush1.msra.mxu0 0.0
    %319 = vmatprep.subr.mxu0 0.0
    %320 = vmatpush1.msra.mxu0 0.0
    %321 = vmatprep.subr.mxu0 0.0
    %322 = vmatpush1.msra.mxu0 0.0
    %323 = vmatprep.subr.mxu0 0.0
    %324 = vmatpush1.msra.mxu0 0.0
    %325 = vmatprep.subr.mxu0 0.0
    %326 = vmatpush1.msra.mxu0 0.0
    %327 = vmatprep.subr.mxu0 0.0
    %328 = vmatpush1.msra.mxu0 0.0
    %329 = vmatprep.subr.mxu0 0.0
    %330 = vmatpush1.msra.mxu0 0.0
    %331 = vmatprep.subr.mxu0 0.0
    %332 = vmatpush1.msra.mxu0 0.0
    %333 = vmatprep.subr.mxu0 0.0
    %334 = vmatpush1.msra.mxu0 0.0
    %335 = vmatprep.subr.mxu0 0.0
    %336 = vmatpush1.msra.mxu0 0.0
    %337 = vmatprep.mubr.f32.mxu0 0.0
    %338 = vmatmul.mubr.f32.gmra.mrb[0].mxu0 %v268
    %v339 = vpop.f32.mrb[0].mxu0
    %v340 = vadd.f32 0.0, %v339
    %v341 = vpop.f32.mrb[0].mxu0
    %342 = vmatprep.mubr.f32.mxu0 0.0
    %343 = vmatmul.mubr.f32.gmra.mrb[0].mxu0 %v271
    %v344 = vpop.f32.mrb[0].mxu0
    %v345 = vadd.f32 0.0, %v344
    %v346 = vpop.f32.mrb[0].mxu0
    %347 = vdwg.mxu0
    %v349 = vsel %vm177, %v340, 0
    %v352 = vsel %vm177, %v345, 0
    %354 = vmatprep.subr.mxu0 0.0
    %355 = vmatpush1.msra.mxu0 %v78
    %356 = vmatprep.subr.mxu0 0.0
    %357 = vmatpush1.msra.mxu0 %v79
    %358 = vmatprep.subr.mxu0 0.0
    %359 = vmatpush1.msra.mxu0 %v80
    %360 = vmatprep.subr.mxu0 0.0
    %361 = vmatpush1.msra.mxu0 %v81
    %362 = vmatprep.subr.mxu0 0.0
    %363 = vmatpush1.msra.mxu0 %v82
    %364 = vmatprep.subr.mxu0 0.0
    %365 = vmatpush1.msra.mxu0 %v83
    %366 = vmatprep.subr.mxu0 0.0
    %367 = vmatpush1.msra.mxu0 %v84
    %368 = vmatprep.subr.mxu0 0.0
    %369 = vmatpush1.msra.mxu0 %v85
    %370 = vmatprep.subr.mxu0 0.0
    %371 = vmatpush1.msra.mxu0 0.0
    %372 = vmatprep.subr.mxu0 0.0
    %373 = vmatpush1.msra.mxu0 0.0
    %374 = vmatprep.subr.mxu0 0.0
    %375 = vmatpush1.msra.mxu0 0.0
    %376 = vmatprep.subr.mxu0 0.0
    %377 = vmatpush1.msra.mxu0 0.0
    %378 = vmatprep.subr.mxu0 0.0
    %379 = vmatpush1.msra.mxu0 0.0
    %380 = vmatprep.subr.mxu0 0.0
    %381 = vmatpush1.msra.mxu0 0.0
    %382 = vmatprep.subr.mxu0 0.0
    %383 = vmatpush1.msra.mxu0 0.0
    %384 = vmatprep.subr.mxu0 0.0
    %385 = vmatpush1.msra.mxu0 0.0
    %386 = vmatprep.subr.mxu0 0.0
    %387 = vmatpush1.msra.mxu0 0.0
    %388 = vmatprep.subr.mxu0 0.0
    %389 = vmatpush1.msra.mxu0 0.0
    %390 = vmatprep.subr.mxu0 0.0
    %391 = vmatpush1.msra.mxu0 0.0
    %392 = vmatprep.subr.mxu0 0.0
    %393 = vmatpush1.msra.mxu0 0.0
    %394 = vmatprep.subr.mxu0 0.0
    %395 = vmatpush1.msra.mxu0 0.0
    %396 = vmatprep.subr.mxu0 0.0
    %397 = vmatpush1.msra.mxu0 0.0
    %398 = vmatprep.subr.mxu0 0.0
    %399 = vmatpush1.msra.mxu0 0.0
    %400 = vmatprep.subr.mxu0 0.0
    %401 = vmatpush1.msra.mxu0 0.0
    %402 = vmatprep.subr.mxu0 0.0
    %403 = vmatpush1.msra.mxu0 0.0
    %404 = vmatprep.subr.mxu0 0.0
    %405 = vmatpush1.msra.mxu0 0.0
    %406 = vmatprep.subr.mxu0 0.0
    %407 = vmatpush1.msra.mxu0 0.0
    %408 = vmatprep.subr.mxu0 0.0
    %409 = vmatpush1.msra.mxu0 0.0
    %410 = vmatprep.subr.mxu0 0.0
    %411 = vmatpush1.msra.mxu0 0.0
    %412 = vmatprep.subr.mxu0 0.0
    %413 = vmatpush1.msra.mxu0 0.0
    %414 = vmatprep.subr.mxu0 0.0
    %415 = vmatpush1.msra.mxu0 0.0
    %416 = vmatprep.subr.mxu0 0.0
    %417 = vmatpush1.msra.mxu0 0.0
    %418 = vmatprep.mubr.f32.mxu0 0.0
    %419 = vmatmul.mubr.f32.gmra.mrb[0].mxu0 %v349
    %v420 = vpop.f32.mrb[0].mxu0
    %v421 = vadd.f32 0.0, %v420
    %v422 = vpop.f32.mrb[0].mxu0
    %423 = vmatprep.mubr.f32.mxu0 0.0
    %424 = vmatmul.mubr.f32.gmra.mrb[0].mxu0 %v352
    %v425 = vpop.f32.mrb[0].mxu0
    %v426 = vadd.f32 0.0, %v425
    %v427 = vpop.f32.mrb[0].mxu0
    %428 = vdwg.mxu0
    %v429 = vadd.f32 %v265, %v421
    %v430 = vadd.f32 %v266, %v426
    %v432 = vsel %vm95, %v68, 0
    %v435 = vsel %vm95, %v69, 0
    %437 = vmatprep.subr.mxu0 0.0
    %438 = vmatpush1.msra.mxu0 %v60
    %439 = vmatprep.subr.mxu0 0.0
    %440 = vmatpush1.msra.mxu0 %v61
    %441 = vmatprep.subr.mxu0 0.0
    %442 = vmatpush1.msra.mxu0 %v62
    %443 = vmatprep.subr.mxu0 0.0
    %444 = vmatpush1.msra.mxu0 %v63
    %445 = vmatprep.subr.mxu0 0.0
    %446 = vmatpush1.msra.mxu0 0.0
    %447 = vmatprep.subr.mxu0 0.0
    %448 = vmatpush1.msra.mxu0 0.0
    %449 = vmatprep.subr.mxu0 0.0
    %450 = vmatpush1.msra.mxu0 0.0
    %451 = vmatprep.subr.mxu0 0.0
    %452 = vmatpush1.msra.mxu0 0.0
    %453 = vmatprep.subr.mxu0 0.0
    %454 = vmatpush1.msra.mxu0 0.0
    %455 = vmatprep.subr.mxu0 0.0
    %456 = vmatpush1.msra.mxu0 0.0
    %457 = vmatprep.subr.mxu0 0.0
    %458 = vmatpush1.msra.mxu0 0.0
    %459 = vmatprep.subr.mxu0 0.0
    %460 = vmatpush1.msra.mxu0 0.0
    %461 = vmatprep.subr.mxu0 0.0
    %462 = vmatpush1.msra.mxu0 0.0
    %463 = vmatprep.subr.mxu0 0.0
    %464 = vmatpush1.msra.mxu0 0.0
    %465 = vmatprep.subr.mxu0 0.0
    %466 = vmatpush1.msra.mxu0 0.0
    %467 = vmatprep.subr.mxu0 0.0
    %468 = vmatpush1.msra.mxu0 0.0
    %469 = vmatprep.subr.mxu0 0.0
    %470 = vmatpush1.msra.mxu0 0.0
    %471 = vmatprep.subr.mxu0 0.0
    %472 = vmatpush1.msra.mxu0 0.0
    %473 = vmatprep.subr.mxu0 0.0
    %474 = vmatpush1.msra.mxu0 0.0
    %475 = vmatprep.subr.mxu0 0.0
    %476 = vmatpush1.msra.mxu0 0.0
    %477 = vmatprep.subr.mxu0 0.0
    %478 = vmatpush1.msra.mxu0 0.0
    %479 = vmatprep.subr.mxu0 0.0
    %480 = vmatpush1.msra.mxu0 0.0
    %481 = vmatprep.subr.mxu0 0.0
    %482 = vmatpush1.msra.mxu0 0.0
    %483 = vmatprep.subr.mxu0 0.0
    %484 = vmatpush1.msra.mxu0 0.0
    %485 = vmatprep.subr.mxu0 0.0
    %486 = vmatpush1.msra.mxu0 0.0
    %487 = vmatprep.subr.mxu0 0.0
    %488 = vmatpush1.msra.mxu0 0.0
    %489 = vmatprep.subr.mxu0 0.0
    %490 = vmatpush1.msra.mxu0 0.0
    %491 = vmatprep.subr.mxu0 0.0
    %492 = vmatpush1.msra.mxu0 0.0
    %493 = vmatprep.subr.mxu0 0.0
    %494 = vmatpush1.msra.mxu0 0.0
    %495 = vmatprep.subr.mxu0 0.0
    %496 = vmatpush1.msra.mxu0 0.0
    %497 = vmatprep.subr.mxu0 0.0
    %498 = vmatpush1.msra.mxu0 0.0
    %499 = vmatprep.subr.mxu0 0.0
    %500 = vmatpush1.msra.mxu0 0.0
    %501 = vmatprep.mubr.f32.mxu0 0.0
    %502 = vmatmul.mubr.f32.gmra.mrb[0].mxu0 %v432
    %v503 = vpop.f32.mrb[0].mxu0
    %v504 = vadd.f32 0.0, %v503
    %v505 = vpop.f32.mrb[0].mxu0
    %506 = vmatprep.mubr.f32.mxu0 0.0
    %507 = vmatmul.mubr.f32.gmra.mrb[0].mxu0 %v435
    %v508 = vpop.f32.mrb[0].mxu0
    %v509 = vadd.f32 0.0, %v508
    %v510 = vpop.f32.mrb[0].mxu0
    %511 = vdwg.mxu0
    %v513 = vsel %vm177, %v504, 0
    %v516 = vsel %vm177, %v509, 0
    %518 = vmatprep.subr.mxu0 0.0
    %519 = vmatpush1.msra.mxu0 %v86
    %520 = vmatprep.subr.mxu0 0.0
    %521 = vmatpush1.msra.mxu0 %v87
    %522 = vmatprep.subr.mxu0 0.0
    %523 = vmatpush1.msra.mxu0 %v88
    %524 = vmatprep.subr.mxu0 0.0
    %525 = vmatpush1.msra.mxu0 %v89
    %526 = vmatprep.subr.mxu0 0.0
    %527 = vmatpush1.msra.mxu0 %v90
    %528 = vmatprep.subr.mxu0 0.0
    %529 = vmatpush1.msra.mxu0 %v91
    %530 = vmatprep.subr.mxu0 0.0
    %531 = vmatpush1.msra.mxu0 %v92
    %532 = vmatprep.subr.mxu0 0.0
    %533 = vmatpush1.msra.mxu0 %v93
    %534 = vmatprep.subr.mxu0 0.0
    %535 = vmatpush1.msra.mxu0 0.0
    %536 = vmatprep.subr.mxu0 0.0
    %537 = vmatpush1.msra.mxu0 0.0
    %538 = vmatprep.subr.mxu0 0.0
    %539 = vmatpush1.msra.mxu0 0.0
    %540 = vmatprep.subr.mxu0 0.0
    %541 = vmatpush1.msra.mxu0 0.0
    %542 = vmatprep.subr.mxu0 0.0
    %543 = vmatpush1.msra.mxu0 0.0
    %544 = vmatprep.subr.mxu0 0.0
    %545 = vmatpush1.msra.mxu0 0.0
    %546 = vmatprep.subr.mxu0 0.0
    %547 = vmatpush1.msra.mxu0 0.0
    %548 = vmatprep.subr.mxu0 0.0
    %549 = vmatpush1.msra.mxu0 0.0
    %550 = vmatprep.subr.mxu0 0.0
    %551 = vmatpush1.msra.mxu0 0.0
    %552 = vmatprep.subr.mxu0 0.0
    %553 = vmatpush1.msra.mxu0 0.0
    %554 = vmatprep.subr.mxu0 0.0
    %555 = vmatpush1.msra.mxu0 0.0
    %556 = vmatprep.subr.mxu0 0.0
    %557 = vmatpush1.msra.mxu0 0.0
    %558 = vmatprep.subr.mxu0 0.0
    %559 = vmatpush1.msra.mxu0 0.0
    %560 = vmatprep.subr.mxu0 0.0
    %561 = vmatpush1.msra.mxu0 0.0
    %562 = vmatprep.subr.mxu0 0.0
    %563 = vmatpush1.msra.mxu0 0.0
    %564 = vmatprep.subr.mxu0 0.0
    %565 = vmatpush1.msra.mxu0 0.0
    %566 = vmatprep.subr.mxu0 0.0
    %567 = vmatpush1.msra.mxu0 0.0
    %568 = vmatprep.subr.mxu0 0.0
    %569 = vmatpush1.msra.mxu0 0.0
    %570 = vmatprep.subr.mxu0 0.0
    %571 = vmatpush1.msra.mxu0 0.0
    %572 = vmatprep.subr.mxu0 0.0
    %573 = vmatpush1.msra.mxu0 0.0
    %574 = vmatprep.subr.mxu0 0.0
    %575 = vmatpush1.msra.mxu0 0.0
    %576 = vmatprep.subr.mxu0 0.0
    %577 = vmatpush1.msra.mxu0 0.0
    %578 = vmatprep.subr.mxu0 0.0
    %579 = vmatpush1.msra.mxu0 0.0
    %580 = vmatprep.subr.mxu0 0.0
    %581 = vmatpush1.msra.mxu0 0.0
    %582 = vmatprep.mubr.f32.mxu0 0.0
    %583 = vmatmul.mubr.f32.gmra.mrb[0].mxu0 %v513
    %v584 = vpop.f32.mrb[0].mxu0
    %v585 = vadd.f32 0.0, %v584
    %v586 = vpop.f32.mrb[0].mxu0
    %587 = vmatprep.mubr.f32.mxu0 0.0
    %588 = vmatmul.mubr.f32.gmra.mrb[0].mxu0 %v516
    %v589 = vpop.f32.mrb[0].mxu0
    %v590 = vadd.f32 0.0, %v589
    %v591 = vpop.f32.mrb[0].mxu0
    %592 = vdwg.mxu0
    %v593 = vadd.f32 %v429, %v585
    %v594 = vadd.f32 %v430, %v590
    %v595 = vmax.f32 %v593, 0.0
    %v596 = vmax.f32 %v594, 0.0
    %v597 = vld [vmem:[%s4] sm:$0xff]
    %v598 = vld [vmem:[%s4 + $0x8] sm:$0xff]
    %v599 = vld [vmem:[%s4 + $0x10] sm:$0xff]
    %v600 = vld [vmem:[%s5] sm:$0xff]
    %v601 = vld [vmem:[%s5 + $0x8] sm:$0xff]
    %v602 = vld [vmem:[%s5 + $0x10] sm:$0xff]
    %v603 = vld [vmem:[%s5 + $0x18] sm:$0xff]
    %v604 = vld [vmem:[%s5 + $0x20] sm:$0xff]
    %v605 = vld [vmem:[%s5 + $0x28] sm:$0xff]
    %v606 = vld [vmem:[%s5 + $0x30] sm:$0xff]
    %v607 = vld [vmem:[%s5 + $0x38] sm:$0xff]
    %v608 = vld [vmem:[%s5 + $0x40] sm:$0xff]
    %v609 = vld [vmem:[%s5 + $0x48] sm:$0xff]
    %v610 = vld [vmem:[%s5 + $0x50] sm:$0xff]
    %v611 = vld [vmem:[%s5 + $0x58] sm:$0xff]
    %v612 = vld [vmem:[%s5 + $0x60] sm:$0xff]
    %v613 = vld [vmem:[%s5 + $0x68] sm:$0xff]
    %v614 = vld [vmem:[%s5 + $0x70] sm:$0xff]
    %v615 = vld [vmem:[%s5 + $0x78] sm:$0xff]
    %v616 = vld [vmem:[%s5 + $0x80] sm:$0xff]
    %v617 = vld [vmem:[%s5 + $0x88] sm:$0xff]
    %v618 = vld [vmem:[%s5 + $0x90] sm:$0xff]
    %v619 = vld [vmem:[%s5 + $0x98] sm:$0xff]
    %v620 = vld [vmem:[%s5 + $0xa0] sm:$0xff]
    %v621 = vld [vmem:[%s5 + $0xa8] sm:$0xff]
    %v622 = vld [vmem:[%s5 + $0xb0] sm:$0xff]
    %v623 = vld [vmem:[%s5 + $0xb8] sm:$0xff]
    %v624 = vld [vmem:[%s6] sm:$0x1]
    %vm625 = vcmask 130048
    %v627 = vsel %vm625, %v597, 0
    %629 = vmatprep.subr.mxu0 0.0
    %630 = vmatpush1.msra.mxu0 %v595
    %631 = vmatprep.subr.mxu0 0.0
    %632 = vmatpush1.msra.mxu0 %v596
    %633 = vmatprep.subr.mxu0 0.0
    %634 = vmatpush1.msra.mxu0 0.0
    %635 = vmatprep.subr.mxu0 0.0
    %636 = vmatpush1.msra.mxu0 0.0
    %637 = vmatprep.subr.mxu0 0.0
    %638 = vmatpush1.msra.mxu0 0.0
    %639 = vmatprep.subr.mxu0 0.0
    %640 = vmatpush1.msra.mxu0 0.0
    %641 = vmatprep.subr.mxu0 0.0
    %642 = vmatpush1.msra.mxu0 0.0
    %643 = vmatprep.subr.mxu0 0.0
    %644 = vmatpush1.msra.mxu0 0.0
    %645 = vmatprep.subr.mxu0 0.0
    %646 = vmatpush1.msra.mxu0 0.0
    %647 = vmatprep.subr.mxu0 0.0
    %648 = vmatpush1.msra.mxu0 0.0
    %649 = vmatprep.subr.mxu0 0.0
    %650 = vmatpush1.msra.mxu0 0.0
    %651 = vmatprep.subr.mxu0 0.0
    %652 = vmatpush1.msra.mxu0 0.0
    %653 = vmatprep.subr.mxu0 0.0
    %654 = vmatpush1.msra.mxu0 0.0
    %655 = vmatprep.subr.mxu0 0.0
    %656 = vmatpush1.msra.mxu0 0.0
    %657 = vmatprep.subr.mxu0 0.0
    %658 = vmatpush1.msra.mxu0 0.0
    %659 = vmatprep.subr.mxu0 0.0
    %660 = vmatpush1.msra.mxu0 0.0
    %661 = vmatprep.subr.mxu0 0.0
    %662 = vmatpush1.msra.mxu0 0.0
    %663 = vmatprep.subr.mxu0 0.0
    %664 = vmatpush1.msra.mxu0 0.0
    %665 = vmatprep.subr.mxu0 0.0
    %666 = vmatpush1.msra.mxu0 0.0
    %667 = vmatprep.subr.mxu0 0.0
    %668 = vmatpush1.msra.mxu0 0.0
    %669 = vmatprep.subr.mxu0 0.0
    %670 = vmatpush1.msra.mxu0 0.0
    %671 = vmatprep.subr.mxu0 0.0
    %672 = vmatpush1.msra.mxu0 0.0
    %673 = vmatprep.subr.mxu0 0.0
    %674 = vmatpush1.msra.mxu0 0.0
    %675 = vmatprep.subr.mxu0 0.0
    %676 = vmatpush1.msra.mxu0 0.0
    %677 = vmatprep.subr.mxu0 0.0
    %678 = vmatpush1.msra.mxu0 0.0
    %679 = vmatprep.subr.mxu0 0.0
    %680 = vmatpush1.msra.mxu0 0.0
    %681 = vmatprep.subr.mxu0 0.0
    %682 = vmatpush1.msra.mxu0 0.0
    %683 = vmatprep.subr.mxu0 0.0
    %684 = vmatpush1.msra.mxu0 0.0
    %685 = vmatprep.subr.mxu0 0.0
    %686 = vmatpush1.msra.mxu0 0.0
    %687 = vmatprep.subr.mxu0 0.0
    %688 = vmatpush1.msra.mxu0 0.0
    %689 = vmatprep.subr.mxu0 0.0
    %690 = vmatpush1.msra.mxu0 0.0
    %691 = vmatprep.subr.mxu0 0.0
    %692 = vmatpush1.msra.mxu0 0.0
    %693 = vmatprep.mubr.f32.mxu0 0.0
    %694 = vmatmul.mubr.f32.gmra.mrb[0].mxu0 %v627
    %v695 = vpop.f32.mrb[0].mxu0
    %v696 = vadd.f32 0.0, %v695
    %v697 = vpop.f32.mrb[0].mxu0
    %698 = vdwg.mxu0
    %v700 = vsel %vm177, %v696, 0
    %702 = vmatprep.subr.mxu0 0.0
    %703 = vmatpush1.msra.mxu0 %v600
    %704 = vmatprep.subr.mxu0 0.0
    %705 = vmatpush1.msra.mxu0 %v601
    %706 = vmatprep.subr.mxu0 0.0
    %707 = vmatpush1.msra.mxu0 %v602
    %708 = vmatprep.subr.mxu0 0.0
    %709 = vmatpush1.msra.mxu0 %v603
    %710 = vmatprep.subr.mxu0 0.0
    %711 = vmatpush1.msra.mxu0 %v604
    %712 = vmatprep.subr.mxu0 0.0
    %713 = vmatpush1.msra.mxu0 %v605
    %714 = vmatprep.subr.mxu0 0.0
    %715 = vmatpush1.msra.mxu0 %v606
    %716 = vmatprep.subr.mxu0 0.0
    %717 = vmatpush1.msra.mxu0 %v607
    %718 = vmatprep.subr.mxu0 0.0
    %719 = vmatpush1.msra.mxu0 0.0
    %720 = vmatprep.subr.mxu0 0.0
    %721 = vmatpush1.msra.mxu0 0.0
    %722 = vmatprep.subr.mxu0 0.0
    %723 = vmatpush1.msra.mxu0 0.0
    %724 = vmatprep.subr.mxu0 0.0
    %725 = vmatpush1.msra.mxu0 0.0
    %726 = vmatprep.subr.mxu0 0.0
    %727 = vmatpush1.msra.mxu0 0.0
    %728 = vmatprep.subr.mxu0 0.0
    %729 = vmatpush1.msra.mxu0 0.0
    %730 = vmatprep.subr.mxu0 0.0
    %731 = vmatpush1.msra.mxu0 0.0
    %732 = vmatprep.subr.mxu0 0.0
    %733 = vmatpush1.msra.mxu0 0.0
    %734 = vmatprep.subr.mxu0 0.0
    %735 = vmatpush1.msra.mxu0 0.0
    %736 = vmatprep.subr.mxu0 0.0
    %737 = vmatpush1.msra.mxu0 0.0
    %738 = vmatprep.subr.mxu0 0.0
    %739 = vmatpush1.msra.mxu0 0.0
    %740 = vmatprep.subr.mxu0 0.0
    %741 = vmatpush1.msra.mxu0 0.0
    %742 = vmatprep.subr.mxu0 0.0
    %743 = vmatpush1.msra.mxu0 0.0
    %744 = vmatprep.subr.mxu0 0.0
    %745 = vmatpush1.msra.mxu0 0.0
    %746 = vmatprep.subr.mxu0 0.0
    %747 = vmatpush1.msra.mxu0 0.0
    %748 = vmatprep.subr.mxu0 0.0
    %749 = vmatpush1.msra.mxu0 0.0
    %750 = vmatprep.subr.mxu0 0.0
    %751 = vmatpush1.msra.mxu0 0.0
    %752 = vmatprep.subr.mxu0 0.0
    %753 = vmatpush1.msra.mxu0 0.0
    %754 = vmatprep.subr.mxu0 0.0
    %755 = vmatpush1.msra.mxu0 0.0
    %756 = vmatprep.subr.mxu0 0.0
    %757 = vmatpush1.msra.mxu0 0.0
    %758 = vmatprep.subr.mxu0 0.0
    %759 = vmatpush1.msra.mxu0 0.0
    %760 = vmatprep.subr.mxu0 0.0
    %761 = vmatpush1.msra.mxu0 0.0
    %762 = vmatprep.subr.mxu0 0.0
    %763 = vmatpush1.msra.mxu0 0.0
    %764 = vmatprep.subr.mxu0 0.0
    %765 = vmatpush1.msra.mxu0 0.0
    %766 = vmatprep.mubr.f32.mxu0 0.0
    %767 = vmatmul.mubr.f32.gmra.mrb[0].mxu0 %v700
    %v768 = vpop.f32.mrb[0].mxu0
    %v769 = vadd.f32 0.0, %v768
    %v770 = vpop.f32.mrb[0].mxu0
    %771 = vdwg.mxu0
    %v773 = vlaneseq
    %v774 = vshrl.u32 %v773, 7
    %v775 = vsub.s32 0, %v774
    %v776 = vrot.slane %v624, %v775
    %v778 = vadd.f32 %v776, %v769
    %v780 = vsel %vm625, %v598, 0
    %782 = vmatprep.subr.mxu0 0.0
    %783 = vmatpush1.msra.mxu0 %v595
    %784 = vmatprep.subr.mxu0 0.0
    %785 = vmatpush1.msra.mxu0 %v596
    %786 = vmatprep.subr.mxu0 0.0
    %787 = vmatpush1.msra.mxu0 0.0
    %788 = vmatprep.subr.mxu0 0.0
    %789 = vmatpush1.msra.mxu0 0.0
    %790 = vmatprep.subr.mxu0 0.0
    %791 = vmatpush1.msra.mxu0 0.0
    %792 = vmatprep.subr.mxu0 0.0
    %793 = vmatpush1.msra.mxu0 0.0
    %794 = vmatprep.subr.mxu0 0.0
    %795 = vmatpush1.msra.mxu0 0.0
    %796 = vmatprep.subr.mxu0 0.0
    %797 = vmatpush1.msra.mxu0 0.0
    %798 = vmatprep.subr.mxu0 0.0
    %799 = vmatpush1.msra.mxu0 0.0
    %800 = vmatprep.subr.mxu0 0.0
    %801 = vmatpush1.msra.mxu0 0.0
    %802 = vmatprep.subr.mxu0 0.0
    %803 = vmatpush1.msra.mxu0 0.0
    %804 = vmatprep.subr.mxu0 0.0
    %805 = vmatpush1.msra.mxu0 0.0
    %806 = vmatprep.subr.mxu0 0.0
    %807 = vmatpush1.msra.mxu0 0.0
    %808 = vmatprep.subr.mxu0 0.0
    %809 = vmatpush1.msra.mxu0 0.0
    %810 = vmatprep.subr.mxu0 0.0
    %811 = vmatpush1.msra.mxu0 0.0
    %812 = vmatprep.subr.mxu0 0.0
    %813 = vmatpush1.msra.mxu0 0.0
    %814 = vmatprep.subr.mxu0 0.0
    %815 = vmatpush1.msra.mxu0 0.0
    %816 = vmatprep.subr.mxu0 0.0
    %817 = vmatpush1.msra.mxu0 0.0
    %818 = vmatprep.subr.mxu0 0.0
    %819 = vmatpush1.msra.mxu0 0.0
    %820 = vmatprep.subr.mxu0 0.0
    %821 = vmatpush1.msra.mxu0 0.0
    %822 = vmatprep.subr.mxu0 0.0
    %823 = vmatpush1.msra.mxu0 0.0
    %824 = vmatprep.subr.mxu0 0.0
    %825 = vmatpush1.msra.mxu0 0.0
    %826 = vmatprep.subr.mxu0 0.0
    %827 = vmatpush1.msra.mxu0 0.0
    %828 = vmatprep.subr.mxu0 0.0
    %829 = vmatpush1.msra.mxu0 0.0
    %830 = vmatprep.subr.mxu0 0.0
    %831 = vmatpush1.msra.mxu0 0.0
    %832 = vmatprep.subr.mxu0 0.0
    %833 = vmatpush1.msra.mxu0 0.0
    %834 = vmatprep.subr.mxu0 0.0
    %835 = vmatpush1.msra.mxu0 0.0
    %836 = vmatprep.subr.mxu0 0.0
    %837 = vmatpush1.msra.mxu0 0.0
    %838 = vmatprep.subr.mxu0 0.0
    %839 = vmatpush1.msra.mxu0 0.0
    %840 = vmatprep.subr.mxu0 0.0
    %841 = vmatpush1.msra.mxu0 0.0
    %842 = vmatprep.subr.mxu0 0.0
    %843 = vmatpush1.msra.mxu0 0.0
    %844 = vmatprep.subr.mxu0 0.0
    %845 = vmatpush1.msra.mxu0 0.0
    %846 = vmatprep.mubr.f32.mxu0 0.0
    %847 = vmatmul.mubr.f32.gmra.mrb[0].mxu0 %v780
    %v848 = vpop.f32.mrb[0].mxu0
    %v849 = vadd.f32 0.0, %v848
    %v850 = vpop.f32.mrb[0].mxu0
    %851 = vdwg.mxu0
    %v853 = vsel %vm177, %v849, 0
    %855 = vmatprep.subr.mxu0 0.0
    %856 = vmatpush1.msra.mxu0 %v608
    %857 = vmatprep.subr.mxu0 0.0
    %858 = vmatpush1.msra.mxu0 %v609
    %859 = vmatprep.subr.mxu0 0.0
    %860 = vmatpush1.msra.mxu0 %v610
    %861 = vmatprep.subr.mxu0 0.0
    %862 = vmatpush1.msra.mxu0 %v611
    %863 = vmatprep.subr.mxu0 0.0
    %864 = vmatpush1.msra.mxu0 %v612
    %865 = vmatprep.subr.mxu0 0.0
    %866 = vmatpush1.msra.mxu0 %v613
    %867 = vmatprep.subr.mxu0 0.0
    %868 = vmatpush1.msra.mxu0 %v614
    %869 = vmatprep.subr.mxu0 0.0
    %870 = vmatpush1.msra.mxu0 %v615
    %871 = vmatprep.subr.mxu0 0.0
    %872 = vmatpush1.msra.mxu0 0.0
    %873 = vmatprep.subr.mxu0 0.0
    %874 = vmatpush1.msra.mxu0 0.0
    %875 = vmatprep.subr.mxu0 0.0
    %876 = vmatpush1.msra.mxu0 0.0
    %877 = vmatprep.subr.mxu0 0.0
    %878 = vmatpush1.msra.mxu0 0.0
    %879 = vmatprep.subr.mxu0 0.0
    %880 = vmatpush1.msra.mxu0 0.0
    %881 = vmatprep.subr.mxu0 0.0
    %882 = vmatpush1.msra.mxu0 0.0
    %883 = vmatprep.subr.mxu0 0.0
    %884 = vmatpush1.msra.mxu0 0.0
    %885 = vmatprep.subr.mxu0 0.0
    %886 = vmatpush1.msra.mxu0 0.0
    %887 = vmatprep.subr.mxu0 0.0
    %888 = vmatpush1.msra.mxu0 0.0
    %889 = vmatprep.subr.mxu0 0.0
    %890 = vmatpush1.msra.mxu0 0.0
    %891 = vmatprep.subr.mxu0 0.0
    %892 = vmatpush1.msra.mxu0 0.0
    %893 = vmatprep.subr.mxu0 0.0
    %894 = vmatpush1.msra.mxu0 0.0
    %895 = vmatprep.subr.mxu0 0.0
    %896 = vmatpush1.msra.mxu0 0.0
    %897 = vmatprep.subr.mxu0 0.0
    %898 = vmatpush1.msra.mxu0 0.0
    %899 = vmatprep.subr.mxu0 0.0
    %900 = vmatpush1.msra.mxu0 0.0
    %901 = vmatprep.subr.mxu0 0.0
    %902 = vmatpush1.msra.mxu0 0.0
    %903 = vmatprep.subr.mxu0 0.0
    %904 = vmatpush1.msra.mxu0 0.0
    %905 = vmatprep.subr.mxu0 0.0
    %906 = vmatpush1.msra.mxu0 0.0
    %907 = vmatprep.subr.mxu0 0.0
    %908 = vmatpush1.msra.mxu0 0.0
    %909 = vmatprep.subr.mxu0 0.0
    %910 = vmatpush1.msra.mxu0 0.0
    %911 = vmatprep.subr.mxu0 0.0
    %912 = vmatpush1.msra.mxu0 0.0
    %913 = vmatprep.subr.mxu0 0.0
    %914 = vmatpush1.msra.mxu0 0.0
    %915 = vmatprep.subr.mxu0 0.0
    %916 = vmatpush1.msra.mxu0 0.0
    %917 = vmatprep.subr.mxu0 0.0
    %918 = vmatpush1.msra.mxu0 0.0
    %919 = vmatprep.mubr.f32.mxu0 0.0
    %920 = vmatmul.mubr.f32.gmra.mrb[0].mxu0 %v853
    %v921 = vpop.f32.mrb[0].mxu0
    %v922 = vadd.f32 0.0, %v921
    %v923 = vpop.f32.mrb[0].mxu0
    %924 = vdwg.mxu0
    %v925 = vadd.f32 %v778, %v922
    %v927 = vsel %vm625, %v599, 0
    %929 = vmatprep.subr.mxu0 0.0
    %930 = vmatpush1.msra.mxu0 %v595
    %931 = vmatprep.subr.mxu0 0.0
    %932 = vmatpush1.msra.mxu0 %v596
    %933 = vmatprep.subr.mxu0 0.0
    %934 = vmatpush1.msra.mxu0 0.0
    %935 = vmatprep.subr.mxu0 0.0
    %936 = vmatpush1.msra.mxu0 0.0
    %937 = vmatprep.subr.mxu0 0.0
    %938 = vmatpush1.msra.mxu0 0.0
    %939 = vmatprep.subr.mxu0 0.0
    %940 = vmatpush1.msra.mxu0 0.0
    %941 = vmatprep.subr.mxu0 0.0
    %942 = vmatpush1.msra.mxu0 0.0
    %943 = vmatprep.subr.mxu0 0.0
    %944 = vmatpush1.msra.mxu0 0.0
    %945 = vmatprep.subr.mxu0 0.0
    %946 = vmatpush1.msra.mxu0 0.0
    %947 = vmatprep.subr.mxu0 0.0
    %948 = vmatpush1.msra.mxu0 0.0
    %949 = vmatprep.subr.mxu0 0.0
    %950 = vmatpush1.msra.mxu0 0.0
    %951 = vmatprep.subr.mxu0 0.0
    %952 = vmatpush1.msra.mxu0 0.0
    %953 = vmatprep.subr.mxu0 0.0
    %954 = vmatpush1.msra.mxu0 0.0
    %955 = vmatprep.subr.mxu0 0.0
    %956 = vmatpush1.msra.mxu0 0.0
    %957 = vmatprep.subr.mxu0 0.0
    %958 = vmatpush1.msra.mxu0 0.0
    %959 = vmatprep.subr.mxu0 0.0
    %960 = vmatpush1.msra.mxu0 0.0
    %961 = vmatprep.subr.mxu0 0.0
    %962 = vmatpush1.msra.mxu0 0.0
    %963 = vmatprep.subr.mxu0 0.0
    %964 = vmatpush1.msra.mxu0 0.0
    %965 = vmatprep.subr.mxu0 0.0
    %966 = vmatpush1.msra.mxu0 0.0
    %967 = vmatprep.subr.mxu0 0.0
    %968 = vmatpush1.msra.mxu0 0.0
    %969 = vmatprep.subr.mxu0 0.0
    %970 = vmatpush1.msra.mxu0 0.0
    %971 = vmatprep.subr.mxu0 0.0
    %972 = vmatpush1.msra.mxu0 0.0
    %973 = vmatprep.subr.mxu0 0.0
    %974 = vmatpush1.msra.mxu0 0.0
    %975 = vmatprep.subr.mxu0 0.0
    %976 = vmatpush1.msra.mxu0 0.0
    %977 = vmatprep.subr.mxu0 0.0
    %978 = vmatpush1.msra.mxu0 0.0
    %979 = vmatprep.subr.mxu0 0.0
    %980 = vmatpush1.msra.mxu0 0.0
    %981 = vmatprep.subr.mxu0 0.0
    %982 = vmatpush1.msra.mxu0 0.0
    %983 = vmatprep.subr.mxu0 0.0
    %984 = vmatpush1.msra.mxu0 0.0
    %985 = vmatprep.subr.mxu0 0.0
    %986 = vmatpush1.msra.mxu0 0.0
    %987 = vmatprep.subr.mxu0 0.0
    %988 = vmatpush1.msra.mxu0 0.0
    %989 = vmatprep.subr.mxu0 0.0
    %990 = vmatpush1.msra.mxu0 0.0
    %991 = vmatprep.subr.mxu0 0.0
    %992 = vmatpush1.msra.mxu0 0.0
    %993 = vmatprep.mubr.f32.mxu0 0.0
    %994 = vmatmul.mubr.f32.gmra.mrb[0].mxu0 %v927
    %v995 = vpop.f32.mrb[0].mxu0
    %v996 = vadd.f32 0.0, %v995
    %v997 = vpop.f32.mrb[0].mxu0
    %998 = vdwg.mxu0
    %v1000 = vsel %vm177, %v996, 0
    %1002 = vmatprep.subr.mxu0 0.0
    %1003 = vmatpush1.msra.mxu0 %v616
    %1004 = vmatprep.subr.mxu0 0.0
    %1005 = vmatpush1.msra.mxu0 %v617
    %1006 = vmatprep.subr.mxu0 0.0
    %1007 = vmatpush1.msra.mxu0 %v618
    %1008 = vmatprep.subr.mxu0 0.0
    %1009 = vmatpush1.msra.mxu0 %v619
    %1010 = vmatprep.subr.mxu0 0.0
    %1011 = vmatpush1.msra.mxu0 %v620
    %1012 = vmatprep.subr.mxu0 0.0
    %1013 = vmatpush1.msra.mxu0 %v621
    %1014 = vmatprep.subr.mxu0 0.0
    %1015 = vmatpush1.msra.mxu0 %v622
    %1016 = vmatprep.subr.mxu0 0.0
    %1017 = vmatpush1.msra.mxu0 %v623
    %1018 = vmatprep.subr.mxu0 0.0
    %1019 = vmatpush1.msra.mxu0 0.0
    %1020 = vmatprep.subr.mxu0 0.0
    %1021 = vmatpush1.msra.mxu0 0.0
    %1022 = vmatprep.subr.mxu0 0.0
    %1023 = vmatpush1.msra.mxu0 0.0
    %1024 = vmatprep.subr.mxu0 0.0
    %1025 = vmatpush1.msra.mxu0 0.0
    %1026 = vmatprep.subr.mxu0 0.0
    %1027 = vmatpush1.msra.mxu0 0.0
    %1028 = vmatprep.subr.mxu0 0.0
    %1029 = vmatpush1.msra.mxu0 0.0
    %1030 = vmatprep.subr.mxu0 0.0
    %1031 = vmatpush1.msra.mxu0 0.0
    %1032 = vmatprep.subr.mxu0 0.0
    %1033 = vmatpush1.msra.mxu0 0.0
    %1034 = vmatprep.subr.mxu0 0.0
    %1035 = vmatpush1.msra.mxu0 0.0
    %1036 = vmatprep.subr.mxu0 0.0
    %1037 = vmatpush1.msra.mxu0 0.0
    %1038 = vmatprep.subr.mxu0 0.0
    %1039 = vmatpush1.msra.mxu0 0.0
    %1040 = vmatprep.subr.mxu0 0.0
    %1041 = vmatpush1.msra.mxu0 0.0
    %1042 = vmatprep.subr.mxu0 0.0
    %1043 = vmatpush1.msra.mxu0 0.0
    %1044 = vmatprep.subr.mxu0 0.0
    %1045 = vmatpush1.msra.mxu0 0.0
    %1046 = vmatprep.subr.mxu0 0.0
    %1047 = vmatpush1.msra.mxu0 0.0
    %1048 = vmatprep.subr.mxu0 0.0
    %1049 = vmatpush1.msra.mxu0 0.0
    %1050 = vmatprep.subr.mxu0 0.0
    %1051 = vmatpush1.msra.mxu0 0.0
    %1052 = vmatprep.subr.mxu0 0.0
    %1053 = vmatpush1.msra.mxu0 0.0
    %1054 = vmatprep.subr.mxu0 0.0
    %1055 = vmatpush1.msra.mxu0 0.0
    %1056 = vmatprep.subr.mxu0 0.0
    %1057 = vmatpush1.msra.mxu0 0.0
    %1058 = vmatprep.subr.mxu0 0.0
    %1059 = vmatpush1.msra.mxu0 0.0
    %1060 = vmatprep.subr.mxu0 0.0
    %1061 = vmatpush1.msra.mxu0 0.0
    %1062 = vmatprep.subr.mxu0 0.0
    %1063 = vmatpush1.msra.mxu0 0.0
    %1064 = vmatprep.subr.mxu0 0.0
    %1065 = vmatpush1.msra.mxu0 0.0
    %1066 = vmatprep.mubr.f32.mxu0 0.0
    %1067 = vmatmul.mubr.f32.gmra.mrb[0].mxu0 %v1000
    %v1068 = vpop.f32.mrb[0].mxu0
    %v1069 = vadd.f32 0.0, %v1068
    %v1070 = vpop.f32.mrb[0].mxu0
    %1071 = vdwg.mxu0
    %v1072 = vadd.f32 %v925, %v1069
    %v1073 = vld [vmem:[%s7] sm:$0xff]
    %v1074 = vld [vmem:[%s7 + $0x8] sm:$0xff]
    %v1075 = vld [vmem:[%s7 + $0x10] sm:$0xff]
    %v1076 = vld [vmem:[%s7 + $0x18] sm:$0xff]
    %v1077 = vld [vmem:[%s7 + $0x20] sm:$0xff]
    %v1078 = vld [vmem:[%s7 + $0x28] sm:$0xff]
    %v1079 = vld [vmem:[%s7 + $0x30] sm:$0xff]
    %v1080 = vld [vmem:[%s7 + $0x38] sm:$0xff]
    %v1081 = vsel %vm177, %v1072, 0.0
    %v1082 = vrot.slane %v1081, 4
    %v1083 = vadd.f32 %v1081, %v1082
    %v1084 = vrot.slane %v1083, 2
    %v1085 = vadd.f32 %v1083, %v1084
    %v1086 = vrot.slane %v1085, 1
    %v1087 = vadd.f32 %v1085, %v1086
    %v1088 = vrcp.pop 8.0
    %v1089 = vmul.f32 %v1087, %v1088
    %v1091 = vsel %vm177, %v1089, 0
    %1093 = vmatprep.subr.mxu0 0.0
    %1094 = vmatpush1.msra.mxu0 %v1073
    %1095 = vmatprep.subr.mxu0 0.0
    %1096 = vmatpush1.msra.mxu0 %v1074
    %1097 = vmatprep.subr.mxu0 0.0
    %1098 = vmatpush1.msra.mxu0 %v1075
    %1099 = vmatprep.subr.mxu0 0.0
    %1100 = vmatpush1.msra.mxu0 %v1076
    %1101 = vmatprep.subr.mxu0 0.0
    %1102 = vmatpush1.msra.mxu0 %v1077
    %1103 = vmatprep.subr.mxu0 0.0
    %1104 = vmatpush1.msra.mxu0 %v1078
    %1105 = vmatprep.subr.mxu0 0.0
    %1106 = vmatpush1.msra.mxu0 %v1079
    %1107 = vmatprep.subr.mxu0 0.0
    %1108 = vmatpush1.msra.mxu0 %v1080
    %1109 = vmatprep.subr.mxu0 0.0
    %1110 = vmatpush1.msra.mxu0 0.0
    %1111 = vmatprep.subr.mxu0 0.0
    %1112 = vmatpush1.msra.mxu0 0.0
    %1113 = vmatprep.subr.mxu0 0.0
    %1114 = vmatpush1.msra.mxu0 0.0
    %1115 = vmatprep.subr.mxu0 0.0
    %1116 = vmatpush1.msra.mxu0 0.0
    %1117 = vmatprep.subr.mxu0 0.0
    %1118 = vmatpush1.msra.mxu0 0.0
    %1119 = vmatprep.subr.mxu0 0.0
    %1120 = vmatpush1.msra.mxu0 0.0
    %1121 = vmatprep.subr.mxu0 0.0
    %1122 = vmatpush1.msra.mxu0 0.0
    %1123 = vmatprep.subr.mxu0 0.0
    %1124 = vmatpush1.msra.mxu0 0.0
    %1125 = vmatprep.subr.mxu0 0.0
    %1126 = vmatpush1.msra.mxu0 0.0
    %1127 = vmatprep.subr.mxu0 0.0
    %1128 = vmatpush1.msra.mxu0 0.0
    %1129 = vmatprep.subr.mxu0 0.0
    %1130 = vmatpush1.msra.mxu0 0.0
    %1131 = vmatprep.subr.mxu0 0.0
    %1132 = vmatpush1.msra.mxu0 0.0
    %1133 = vmatprep.subr.mxu0 0.0
    %1134 = vmatpush1.msra.mxu0 0.0
    %1135 = vmatprep.subr.mxu0 0.0
    %1136 = vmatpush1.msra.mxu0 0.0
    %1137 = vmatprep.subr.mxu0 0.0
    %1138 = vmatpush1.msra.mxu0 0.0
    %1139 = vmatprep.subr.mxu0 0.0
    %1140 = vmatpush1.msra.mxu0 0.0
    %1141 = vmatprep.subr.mxu0 0.0
    %1142 = vmatpush1.msra.mxu0 0.0
    %1143 = vmatprep.subr.mxu0 0.0
    %1144 = vmatpush1.msra.mxu0 0.0
    %1145 = vmatprep.subr.mxu0 0.0
    %1146 = vmatpush1.msra.mxu0 0.0
    %1147 = vmatprep.subr.mxu0 0.0
    %1148 = vmatpush1.msra.mxu0 0.0
    %1149 = vmatprep.subr.mxu0 0.0
    %1150 = vmatpush1.msra.mxu0 0.0
    %1151 = vmatprep.subr.mxu0 0.0
    %1152 = vmatpush1.msra.mxu0 0.0
    %1153 = vmatprep.subr.mxu0 0.0
    %1154 = vmatpush1.msra.mxu0 0.0
    %1155 = vmatprep.subr.mxu0 0.0
    %1156 = vmatpush1.msra.mxu0 0.0
    %1157 = vmatprep.mubr.f32.mxu0 0.0
    %1158 = vmatmul.mubr.f32.gmra.mrb[0].mxu0 %v1091
    %v1159 = vpop.f32.mrb[0].mxu0
    %v1160 = vadd.f32 0.0, %v1159
    %v1161 = vpop.f32.mrb[0].mxu0
    %1162 = vdwg.mxu0
    %v1163 = vlaneseq
    %v1164 = vshrl.u32 %v1163, 7
    %v1165 = vsub.s32 0, %v1164
    %v1166 = vrot.slane %v1160, %v1165
    %v1167 = vsub.f32 %v1072, %v1166
    %v1168 = vmul.f32 %v1167, %v1167
    %v1169 = vsel %vm177, %v1168, 0.0
    %v1170 = vrot.slane %v1169, 4
    %v1171 = vadd.f32 %v1169, %v1170
    %v1172 = vrot.slane %v1171, 2
    %v1173 = vadd.f32 %v1171, %v1172
    %v1174 = vrot.slane %v1173, 1
    %v1175 = vadd.f32 %v1173, %v1174
    %v1176 = vmul.f32 %v1175, %v1088
    %v1178 = vsel %vm177, %v1176, 0
    %1180 = vmatprep.subr.mxu0 0.0
    %1181 = vmatpush1.msra.mxu0 %v1073
    %1182 = vmatprep.subr.mxu0 0.0
    %1183 = vmatpush1.msra.mxu0 %v1074
    %1184 = vmatprep.subr.mxu0 0.0
    %1185 = vmatpush1.msra.mxu0 %v1075
    %1186 = vmatprep.subr.mxu0 0.0
    %1187 = vmatpush1.msra.mxu0 %v1076
    %1188 = vmatprep.subr.mxu0 0.0
    %1189 = vmatpush1.msra.mxu0 %v1077
    %1190 = vmatprep.subr.mxu0 0.0
    %1191 = vmatpush1.msra.mxu0 %v1078
    %1192 = vmatprep.subr.mxu0 0.0
    %1193 = vmatpush1.msra.mxu0 %v1079
    %1194 = vmatprep.subr.mxu0 0.0
    %1195 = vmatpush1.msra.mxu0 %v1080
    %1196 = vmatprep.subr.mxu0 0.0
    %1197 = vmatpush1.msra.mxu0 0.0
    %1198 = vmatprep.subr.mxu0 0.0
    %1199 = vmatpush1.msra.mxu0 0.0
    %1200 = vmatprep.subr.mxu0 0.0
    %1201 = vmatpush1.msra.mxu0 0.0
    %1202 = vmatprep.subr.mxu0 0.0
    %1203 = vmatpush1.msra.mxu0 0.0
    %1204 = vmatprep.subr.mxu0 0.0
    %1205 = vmatpush1.msra.mxu0 0.0
    %1206 = vmatprep.subr.mxu0 0.0
    %1207 = vmatpush1.msra.mxu0 0.0
    %1208 = vmatprep.subr.mxu0 0.0
    %1209 = vmatpush1.msra.mxu0 0.0
    %1210 = vmatprep.subr.mxu0 0.0
    %1211 = vmatpush1.msra.mxu0 0.0
    %1212 = vmatprep.subr.mxu0 0.0
    %1213 = vmatpush1.msra.mxu0 0.0
    %1214 = vmatprep.subr.mxu0 0.0
    %1215 = vmatpush1.msra.mxu0 0.0
    %1216 = vmatprep.subr.mxu0 0.0
    %1217 = vmatpush1.msra.mxu0 0.0
    %1218 = vmatprep.subr.mxu0 0.0
    %1219 = vmatpush1.msra.mxu0 0.0
    %1220 = vmatprep.subr.mxu0 0.0
    %1221 = vmatpush1.msra.mxu0 0.0
    %1222 = vmatprep.subr.mxu0 0.0
    %1223 = vmatpush1.msra.mxu0 0.0
    %1224 = vmatprep.subr.mxu0 0.0
    %1225 = vmatpush1.msra.mxu0 0.0
    %1226 = vmatprep.subr.mxu0 0.0
    %1227 = vmatpush1.msra.mxu0 0.0
    %1228 = vmatprep.subr.mxu0 0.0
    %1229 = vmatpush1.msra.mxu0 0.0
    %1230 = vmatprep.subr.mxu0 0.0
    %1231 = vmatpush1.msra.mxu0 0.0
    %1232 = vmatprep.subr.mxu0 0.0
    %1233 = vmatpush1.msra.mxu0 0.0
    %1234 = vmatprep.subr.mxu0 0.0
    %1235 = vmatpush1.msra.mxu0 0.0
    %1236 = vmatprep.subr.mxu0 0.0
    %1237 = vmatpush1.msra.mxu0 0.0
    %1238 = vmatprep.subr.mxu0 0.0
    %1239 = vmatpush1.msra.mxu0 0.0
    %1240 = vmatprep.subr.mxu0 0.0
    %1241 = vmatpush1.msra.mxu0 0.0
    %1242 = vmatprep.subr.mxu0 0.0
    %1243 = vmatpush1.msra.mxu0 0.0
    %1244 = vmatprep.mubr.f32.mxu0 0.0
    %1245 = vmatmul.mubr.f32.gmra.mrb[0].mxu0 %v1178
    %v1246 = vpop.f32.mrb[0].mxu0
    %v1247 = vadd.f32 1e-05, %v1246
    %v1248 = vpop.f32.mrb[0].mxu0
    %1249 = vdwg.mxu0
    %v1250 = vrsqrt.pop %v1247
    %v1251 = vlaneseq
    %v1252 = vshrl.u32 %v1251, 7
    %v1253 = vsub.s32 0, %v1252
    %v1254 = vrot.slane %v1250, %v1253
    %v1255 = vmul.f32 %v1167, %v1254
    %v1256 = vld [vmem:[%s8] sm:$0x1]
    %v1258 = vlaneseq
    %v1259 = vshrl.u32 %v1258, 7
    %v1260 = vsub.s32 0, %v1259
    %v1261 = vrot.slane %v1256, %v1260
    %v1263 = vmul.f32 %v1255, %v1261
    %v1264 = vld [vmem:[%s9] sm:$0x1]
    %v1266 = vlaneseq
    %v1267 = vshrl.u32 %v1266, 7
    %v1268 = vsub.s32 0, %v1267
    %v1269 = vrot.slane %v1264, %v1268
    %v1271 = vadd.f32 %v1263, %v1269
    %v1272 = vmax.f32 %v1271, 0.0
    %v1273 = vld [vmem:[%s10] sm:$0x3]
    %v1274 = vld [vmem:[%s10 + $0x2] sm:$0x3]
    %v1275 = vld [vmem:[%s10 + $0x4] sm:$0x3]
    %v1276 = vld [vmem:[%s11] sm:$0xff]
    %v1277 = vld [vmem:[%s11 + $0x8] sm:$0xff]
    %v1278 = vld [vmem:[%s11 + $0x10] sm:$0xff]
    %v1279 = vld [vmem:[%s11 + $0x18] sm:$0xff]
    %v1280 = vld [vmem:[%s11 + $0x20] sm:$0xff]
    %v1281 = vld [vmem:[%s11 + $0x28] sm:$0xff]
    %v1282 = vld [vmem:[%s11 + $0x30] sm:$0xff]
    %v1283 = vld [vmem:[%s11 + $0x38] sm:$0xff]
    %v1284 = vld [vmem:[%s11 + $0x40] sm:$0xff]
    %v1285 = vld [vmem:[%s11 + $0x48] sm:$0xff]
    %v1286 = vld [vmem:[%s11 + $0x50] sm:$0xff]
    %v1287 = vld [vmem:[%s11 + $0x58] sm:$0xff]
    %v1288 = vld [vmem:[%s11 + $0x60] sm:$0xff]
    %v1289 = vld [vmem:[%s11 + $0x68] sm:$0xff]
    %v1290 = vld [vmem:[%s11 + $0x70] sm:$0xff]
    %v1291 = vld [vmem:[%s11 + $0x78] sm:$0xff]
    %v1292 = vld [vmem:[%s11 + $0x80] sm:$0xff]
    %v1293 = vld [vmem:[%s11 + $0x88] sm:$0xff]
    %v1294 = vld [vmem:[%s11 + $0x90] sm:$0xff]
    %v1295 = vld [vmem:[%s11 + $0x98] sm:$0xff]
    %v1296 = vld [vmem:[%s11 + $0xa0] sm:$0xff]
    %v1297 = vld [vmem:[%s11 + $0xa8] sm:$0xff]
    %v1298 = vld [vmem:[%s11 + $0xb0] sm:$0xff]
    %v1299 = vld [vmem:[%s11 + $0xb8] sm:$0xff]
    %v1300 = vld [vmem:[%s12] sm:$0x1]
    %vm1301 = vcmask 64512
    %v1303 = vsel %vm1301, %v1273, 0
    %1305 = vmatprep.subr.mxu0 0.0
    %1306 = vmatpush1.msra.mxu0 %v1272
    %1307 = vmatprep.subr.mxu0 0.0
    %1308 = vmatpush1.msra.mxu0 0.0
    %1309 = vmatprep.subr.mxu0 0.0
    %1310 = vmatpush1.msra.mxu0 0.0
    %1311 = vmatprep.subr.mxu0 0.0
    %1312 = vmatpush1.msra.mxu0 0.0
    %1313 = vmatprep.subr.mxu0 0.0
    %1314 = vmatpush1.msra.mxu0 0.0
    %1315 = vmatprep.subr.mxu0 0.0
    %1316 = vmatpush1.msra.mxu0 0.0
    %1317 = vmatprep.subr.mxu0 0.0
    %1318 = vmatpush1.msra.mxu0 0.0
    %1319 = vmatprep.subr.mxu0 0.0
    %1320 = vmatpush1.msra.mxu0 0.0
    %1321 = vmatprep.subr.mxu0 0.0
    %1322 = vmatpush1.msra.mxu0 0.0
    %1323 = vmatprep.subr.mxu0 0.0
    %1324 = vmatpush1.msra.mxu0 0.0
    %1325 = vmatprep.subr.mxu0 0.0
    %1326 = vmatpush1.msra.mxu0 0.0
    %1327 = vmatprep.subr.mxu0 0.0
    %1328 = vmatpush1.msra.mxu0 0.0
    %1329 = vmatprep.subr.mxu0 0.0
    %1330 = vmatpush1.msra.mxu0 0.0
    %1331 = vmatprep.subr.mxu0 0.0
    %1332 = vmatpush1.msra.mxu0 0.0
    %1333 = vmatprep.subr.mxu0 0.0
    %1334 = vmatpush1.msra.mxu0 0.0
    %1335 = vmatprep.subr.mxu0 0.0
    %1336 = vmatpush1.msra.mxu0 0.0
    %1337 = vmatprep.subr.mxu0 0.0
    %1338 = vmatpush1.msra.mxu0 0.0
    %1339 = vmatprep.subr.mxu0 0.0
    %1340 = vmatpush1.msra.mxu0 0.0
    %1341 = vmatprep.subr.mxu0 0.0
    %1342 = vmatpush1.msra.mxu0 0.0
    %1343 = vmatprep.subr.mxu0 0.0
    %1344 = vmatpush1.msra.mxu0 0.0
    %1345 = vmatprep.subr.mxu0 0.0
    %1346 = vmatpush1.msra.mxu0 0.0
    %1347 = vmatprep.subr.mxu0 0.0
    %1348 = vmatpush1.msra.mxu0 0.0
    %1349 = vmatprep.subr.mxu0 0.0
    %1350 = vmatpush1.msra.mxu0 0.0
    %1351 = vmatprep.subr.mxu0 0.0
    %1352 = vmatpush1.msra.mxu0 0.0
    %1353 = vmatprep.subr.mxu0 0.0
    %1354 = vmatpush1.msra.mxu0 0.0
    %1355 = vmatprep.subr.mxu0 0.0
    %1356 = vmatpush1.msra.mxu0 0.0
    %1357 = vmatprep.subr.mxu0 0.0
    %1358 = vmatpush1.msra.mxu0 0.0
    %1359 = vmatprep.subr.mxu0 0.0
    %1360 = vmatpush1.msra.mxu0 0.0
    %1361 = vmatprep.subr.mxu0 0.0
    %1362 = vmatpush1.msra.mxu0 0.0
    %1363 = vmatprep.subr.mxu0 0.0
    %1364 = vmatpush1.msra.mxu0 0.0
    %1365 = vmatprep.subr.mxu0 0.0
    %1366 = vmatpush1.msra.mxu0 0.0
    %1367 = vmatprep.subr.mxu0 0.0
    %1368 = vmatpush1.msra.mxu0 0.0
    %1369 = vmatprep.mubr.f32.mxu0 0.0
    %1370 = vmatmul.mubr.f32.gmra.mrb[0].mxu0 %v1303
    %v1371 = vpop.f32.mrb[0].mxu0
    %v1372 = vadd.f32 0.0, %v1371
    %v1373 = vpop.f32.mrb[0].mxu0
    %1374 = vdwg.mxu0
    %v1376 = vsel %vm177, %v1372, 0
    %1378 = vmatprep.subr.mxu0 0.0
    %1379 = vmatpush1.msra.mxu0 %v1276
    %1380 = vmatprep.subr.mxu0 0.0
    %1381 = vmatpush1.msra.mxu0 %v1277
    %1382 = vmatprep.subr.mxu0 0.0
    %1383 = vmatpush1.msra.mxu0 %v1278
    %1384 = vmatprep.subr.mxu0 0.0
    %1385 = vmatpush1.msra.mxu0 %v1279
    %1386 = vmatprep.subr.mxu0 0.0
    %1387 = vmatpush1.msra.mxu0 %v1280
    %1388 = vmatprep.subr.mxu0 0.0
    %1389 = vmatpush1.msra.mxu0 %v1281
    %1390 = vmatprep.subr.mxu0 0.0
    %1391 = vmatpush1.msra.mxu0 %v1282
    %1392 = vmatprep.subr.mxu0 0.0
    %1393 = vmatpush1.msra.mxu0 %v1283
    %1394 = vmatprep.subr.mxu0 0.0
    %1395 = vmatpush1.msra.mxu0 0.0
    %1396 = vmatprep.subr.mxu0 0.0
    %1397 = vmatpush1.msra.mxu0 0.0
    %1398 = vmatprep.subr.mxu0 0.0
    %1399 = vmatpush1.msra.mxu0 0.0
    %1400 = vmatprep.subr.mxu0 0.0
    %1401 = vmatpush1.msra.mxu0 0.0
    %1402 = vmatprep.subr.mxu0 0.0
    %1403 = vmatpush1.msra.mxu0 0.0
    %1404 = vmatprep.subr.mxu0 0.0
    %1405 = vmatpush1.msra.mxu0 0.0
    %1406 = vmatprep.subr.mxu0 0.0
    %1407 = vmatpush1.msra.mxu0 0.0
    %1408 = vmatprep.subr.mxu0 0.0
    %1409 = vmatpush1.msra.mxu0 0.0
    %1410 = vmatprep.subr.mxu0 0.0
    %1411 = vmatpush1.msra.mxu0 0.0
    %1412 = vmatprep.subr.mxu0 0.0
    %1413 = vmatpush1.msra.mxu0 0.0
    %1414 = vmatprep.subr.mxu0 0.0
    %1415 = vmatpush1.msra.mxu0 0.0
    %1416 = vmatprep.subr.mxu0 0.0
    %1417 = vmatpush1.msra.mxu0 0.0
    %1418 = vmatprep.subr.mxu0 0.0
    %1419 = vmatpush1.msra.mxu0 0.0
    %1420 = vmatprep.subr.mxu0 0.0
    %1421 = vmatpush1.msra.mxu0 0.0
    %1422 = vmatprep.subr.mxu0 0.0
    %1423 = vmatpush1.msra.mxu0 0.0
    %1424 = vmatprep.subr.mxu0 0.0
    %1425 = vmatpush1.msra.mxu0 0.0
    %1426 = vmatprep.subr.mxu0 0.0
    %1427 = vmatpush1.msra.mxu0 0.0
    %1428 = vmatprep.subr.mxu0 0.0
    %1429 = vmatpush1.msra.mxu0 0.0
    %1430 = vmatprep.subr.mxu0 0.0
    %1431 = vmatpush1.msra.mxu0 0.0
    %1432 = vmatprep.subr.mxu0 0.0
    %1433 = vmatpush1.msra.mxu0 0.0
    %1434 = vmatprep.subr.mxu0 0.0
    %1435 = vmatpush1.msra.mxu0 0.0
    %1436 = vmatprep.subr.mxu0 0.0
    %1437 = vmatpush1.msra.mxu0 0.0
    %1438 = vmatprep.subr.mxu0 0.0
    %1439 = vmatpush1.msra.mxu0 0.0
    %1440 = vmatprep.subr.mxu0 0.0
    %1441 = vmatpush1.msra.mxu0 0.0
    %1442 = vmatprep.mubr.f32.mxu0 0.0
    %1443 = vmatmul.mubr.f32.gmra.mrb[0].mxu0 %v1376
    %v1444 = vpop.f32.mrb[0].mxu0
    %v1445 = vadd.f32 0.0, %v1444
    %v1446 = vpop.f32.mrb[0].mxu0
    %1447 = vdwg.mxu0
    %v1449 = vlaneseq
    %v1450 = vshrl.u32 %v1449, 7
    %v1451 = vsub.s32 0, %v1450
    %v1452 = vrot.slane %v1300, %v1451
    %v1454 = vadd.f32 %v1452, %v1445
    %v1456 = vsel %vm1301, %v1274, 0
    %1458 = vmatprep.subr.mxu0 0.0
    %1459 = vmatpush1.msra.mxu0 %v1272
    %1460 = vmatprep.subr.mxu0 0.0
    %1461 = vmatpush1.msra.mxu0 0.0
    %1462 = vmatprep.subr.mxu0 0.0
    %1463 = vmatpush1.msra.mxu0 0.0
    %1464 = vmatprep.subr.mxu0 0.0
    %1465 = vmatpush1.msra.mxu0 0.0
    %1466 = vmatprep.subr.mxu0 0.0
    %1467 = vmatpush1.msra.mxu0 0.0
    %1468 = vmatprep.subr.mxu0 0.0
    %1469 = vmatpush1.msra.mxu0 0.0
    %1470 = vmatprep.subr.mxu0 0.0
    %1471 = vmatpush1.msra.mxu0 0.0
    %1472 = vmatprep.subr.mxu0 0.0
    %1473 = vmatpush1.msra.mxu0 0.0
    %1474 = vmatprep.subr.mxu0 0.0
    %1475 = vmatpush1.msra.mxu0 0.0
    %1476 = vmatprep.subr.mxu0 0.0
    %1477 = vmatpush1.msra.mxu0 0.0
    %1478 = vmatprep.subr.mxu0 0.0
    %1479 = vmatpush1.msra.mxu0 0.0
    %1480 = vmatprep.subr.mxu0 0.0
    %1481 = vmatpush1.msra.mxu0 0.0
    %1482 = vmatprep.subr.mxu0 0.0
    %1483 = vmatpush1.msra.mxu0 0.0
    %1484 = vmatprep.subr.mxu0 0.0
    %1485 = vmatpush1.msra.mxu0 0.0
    %1486 = vmatprep.subr.mxu0 0.0
    %1487 = vmatpush1.msra.mxu0 0.0
    %1488 = vmatprep.subr.mxu0 0.0
    %1489 = vmatpush1.msra.mxu0 0.0
    %1490 = vmatprep.subr.mxu0 0.0
    %1491 = vmatpush1.msra.mxu0 0.0
    %1492 = vmatprep.subr.mxu0 0.0
    %1493 = vmatpush1.msra.mxu0 0.0
    %1494 = vmatprep.subr.mxu0 0.0
    %1495 = vmatpush1.msra.mxu0 0.0
    %1496 = vmatprep.subr.mxu0 0.0
    %1497 = vmatpush1.msra.mxu0 0.0
    %1498 = vmatprep.subr.mxu0 0.0
    %1499 = vmatpush1.msra.mxu0 0.0
    %1500 = vmatprep.subr.mxu0 0.0
    %1501 = vmatpush1.msra.mxu0 0.0
    %1502 = vmatprep.subr.mxu0 0.0
    %1503 = vmatpush1.msra.mxu0 0.0
    %1504 = vmatprep.subr.mxu0 0.0
    %1505 = vmatpush1.msra.mxu0 0.0
    %1506 = vmatprep.subr.mxu0 0.0
    %1507 = vmatpush1.msra.mxu0 0.0
    %1508 = vmatprep.subr.mxu0 0.0
    %1509 = vmatpush1.msra.mxu0 0.0
    %1510 = vmatprep.subr.mxu0 0.0
    %1511 = vmatpush1.msra.mxu0 0.0
    %1512 = vmatprep.subr.mxu0 0.0
    %1513 = vmatpush1.msra.mxu0 0.0
    %1514 = vmatprep.subr.mxu0 0.0
    %1515 = vmatpush1.msra.mxu0 0.0
    %1516 = vmatprep.subr.mxu0 0.0
    %1517 = vmatpush1.msra.mxu0 0.0
    %1518 = vmatprep.subr.mxu0 0.0
    %1519 = vmatpush1.msra.mxu0 0.0
    %1520 = vmatprep.subr.mxu0 0.0
    %1521 = vmatpush1.msra.mxu0 0.0
    %1522 = vmatprep.mubr.f32.mxu0 0.0
    %1523 = vmatmul.mubr.f32.gmra.mrb[0].mxu0 %v1456
    %v1524 = vpop.f32.mrb[0].mxu0
    %v1525 = vadd.f32 0.0, %v1524
    %v1526 = vpop.f32.mrb[0].mxu0
    %1527 = vdwg.mxu0
    %v1529 = vsel %vm177, %v1525, 0
    %1531 = vmatprep.subr.mxu0 0.0
    %1532 = vmatpush1.msra.mxu0 %v1284
    %1533 = vmatprep.subr.mxu0 0.0
    %1534 = vmatpush1.msra.mxu0 %v1285
    %1535 = vmatprep.subr.mxu0 0.0
    %1536 = vmatpush1.msra.mxu0 %v1286
    %1537 = vmatprep.subr.mxu0 0.0
    %1538 = vmatpush1.msra.mxu0 %v1287
    %1539 = vmatprep.subr.mxu0 0.0
    %1540 = vmatpush1.msra.mxu0 %v1288
    %1541 = vmatprep.subr.mxu0 0.0
    %1542 = vmatpush1.msra.mxu0 %v1289
    %1543 = vmatprep.subr.mxu0 0.0
    %1544 = vmatpush1.msra.mxu0 %v1290
    %1545 = vmatprep.subr.mxu0 0.0
    %1546 = vmatpush1.msra.mxu0 %v1291
    %1547 = vmatprep.subr.mxu0 0.0
    %1548 = vmatpush1.msra.mxu0 0.0
    %1549 = vmatprep.subr.mxu0 0.0
    %1550 = vmatpush1.msra.mxu0 0.0
    %1551 = vmatprep.subr.mxu0 0.0
    %1552 = vmatpush1.msra.mxu0 0.0
    %1553 = vmatprep.subr.mxu0 0.0
    %1554 = vmatpush1.msra.mxu0 0.0
    %1555 = vmatprep.subr.mxu0 0.0
    %1556 = vmatpush1.msra.mxu0 0.0
    %1557 = vmatprep.subr.mxu0 0.0
    %1558 = vmatpush1.msra.mxu0 0.0
    %1559 = vmatprep.subr.mxu0 0.0
    %1560 = vmatpush1.msra.mxu0 0.0
    %1561 = vmatprep.subr.mxu0 0.0
    %1562 = vmatpush1.msra.mxu0 0.0
    %1563 = vmatprep.subr.mxu0 0.0
    %1564 = vmatpush1.msra.mxu0 0.0
    %1565 = vmatprep.subr.mxu0 0.0
    %1566 = vmatpush1.msra.mxu0 0.0
    %1567 = vmatprep.subr.mxu0 0.0
    %1568 = vmatpush1.msra.mxu0 0.0
    %1569 = vmatprep.subr.mxu0 0.0
    %1570 = vmatpush1.msra.mxu0 0.0
    %1571 = vmatprep.subr.mxu0 0.0
    %1572 = vmatpush1.msra.mxu0 0.0
    %1573 = vmatprep.subr.mxu0 0.0
    %1574 = vmatpush1.msra.mxu0 0.0
    %1575 = vmatprep.subr.mxu0 0.0
    %1576 = vmatpush1.msra.mxu0 0.0
    %1577 = vmatprep.subr.mxu0 0.0
    %1578 = vmatpush1.msra.mxu0 0.0
    %1579 = vmatprep.subr.mxu0 0.0
    %1580 = vmatpush1.msra.mxu0 0.0
    %1581 = vmatprep.subr.mxu0 0.0
    %1582 = vmatpush1.msra.mxu0 0.0
    %1583 = vmatprep.subr.mxu0 0.0
    %1584 = vmatpush1.msra.mxu0 0.0
    %1585 = vmatprep.subr.mxu0 0.0
    %1586 = vmatpush1.msra.mxu0 0.0
    %1587 = vmatprep.subr.mxu0 0.0
    %1588 = vmatpush1.msra.mxu0 0.0
    %1589 = vmatprep.subr.mxu0 0.0
    %1590 = vmatpush1.msra.mxu0 0.0
    %1591 = vmatprep.subr.mxu0 0.0
    %1592 = vmatpush1.msra.mxu0 0.0
    %1593 = vmatprep.subr.mxu0 0.0
    %1594 = vmatpush1.msra.mxu0 0.0
    %1595 = vmatprep.mubr.f32.mxu0 0.0
    %1596 = vmatmul.mubr.f32.gmra.mrb[0].mxu0 %v1529
    %v1597 = vpop.f32.mrb[0].mxu0
    %v1598 = vadd.f32 0.0, %v1597
    %v1599 = vpop.f32.mrb[0].mxu0
    %1600 = vdwg.mxu0
    %v1601 = vadd.f32 %v1454, %v1598
    %v1603 = vsel %vm1301, %v1275, 0
    %1605 = vmatprep.subr.mxu0 0.0
    %1606 = vmatpush1.msra.mxu0 %v1272
    %1607 = vmatprep.subr.mxu0 0.0
    %1608 = vmatpush1.msra.mxu0 0.0
    %1609 = vmatprep.subr.mxu0 0.0
    %1610 = vmatpush1.msra.mxu0 0.0
    %1611 = vmatprep.subr.mxu0 0.0
    %1612 = vmatpush1.msra.mxu0 0.0
    %1613 = vmatprep.subr.mxu0 0.0
    %1614 = vmatpush1.msra.mxu0 0.0
    %1615 = vmatprep.subr.mxu0 0.0
    %1616 = vmatpush1.msra.mxu0 0.0
    %1617 = vmatprep.subr.mxu0 0.0
    %1618 = vmatpush1.msra.mxu0 0.0
    %1619 = vmatprep.subr.mxu0 0.0
    %1620 = vmatpush1.msra.mxu0 0.0
    %1621 = vmatprep.subr.mxu0 0.0
    %1622 = vmatpush1.msra.mxu0 0.0
    %1623 = vmatprep.subr.mxu0 0.0
    %1624 = vmatpush1.msra.mxu0 0.0
    %1625 = vmatprep.subr.mxu0 0.0
    %1626 = vmatpush1.msra.mxu0 0.0
    %1627 = vmatprep.subr.mxu0 0.0
    %1628 = vmatpush1.msra.mxu0 0.0
    %1629 = vmatprep.subr.mxu0 0.0
    %1630 = vmatpush1.msra.mxu0 0.0
    %1631 = vmatprep.subr.mxu0 0.0
    %1632 = vmatpush1.msra.mxu0 0.0
    %1633 = vmatprep.subr.mxu0 0.0
    %1634 = vmatpush1.msra.mxu0 0.0
    %1635 = vmatprep.subr.mxu0 0.0
    %1636 = vmatpush1.msra.mxu0 0.0
    %1637 = vmatprep.subr.mxu0 0.0
    %1638 = vmatpush1.msra.mxu0 0.0
    %1639 = vmatprep.subr.mxu0 0.0
    %1640 = vmatpush1.msra.mxu0 0.0
    %1641 = vmatprep.subr.mxu0 0.0
    %1642 = vmatpush1.msra.mxu0 0.0
    %1643 = vmatprep.subr.mxu0 0.0
    %1644 = vmatpush1.msra.mxu0 0.0
    %1645 = vmatprep.subr.mxu0 0.0
    %1646 = vmatpush1.msra.mxu0 0.0
    %1647 = vmatprep.subr.mxu0 0.0
    %1648 = vmatpush1.msra.mxu0 0.0
    %1649 = vmatprep.subr.mxu0 0.0
    %1650 = vmatpush1.msra.mxu0 0.0
    %1651 = vmatprep.subr.mxu0 0.0
    %1652 = vmatpush1.msra.mxu0 0.0
    %1653 = vmatprep.subr.mxu0 0.0
    %1654 = vmatpush1.msra.mxu0 0.0
    %1655 = vmatprep.subr.mxu0 0.0
    %1656 = vmatpush1.msra.mxu0 0.0
    %1657 = vmatprep.subr.mxu0 0.0
    %1658 = vmatpush1.msra.mxu0 0.0
    %1659 = vmatprep.subr.mxu0 0.0
    %1660 = vmatpush1.msra.mxu0 0.0
    %1661 = vmatprep.subr.mxu0 0.0
    %1662 = vmatpush1.msra.mxu0 0.0
    %1663 = vmatprep.subr.mxu0 0.0
    %1664 = vmatpush1.msra.mxu0 0.0
    %1665 = vmatprep.subr.mxu0 0.0
    %1666 = vmatpush1.msra.mxu0 0.0
    %1667 = vmatprep.subr.mxu0 0.0
    %1668 = vmatpush1.msra.mxu0 0.0
    %1669 = vmatprep.mubr.f32.mxu0 0.0
    %1670 = vmatmul.mubr.f32.gmra.mrb[0].mxu0 %v1603
    %v1671 = vpop.f32.mrb[0].mxu0
    %v1672 = vadd.f32 0.0, %v1671
    %v1673 = vpop.f32.mrb[0].mxu0
    %1674 = vdwg.mxu0
    %v1676 = vsel %vm177, %v1672, 0
    %1678 = vmatprep.subr.mxu0 0.0
    %1679 = vmatpush1.msra.mxu0 %v1292
    %1680 = vmatprep.subr.mxu0 0.0
    %1681 = vmatpush1.msra.mxu0 %v1293
    %1682 = vmatprep.subr.mxu0 0.0
    %1683 = vmatpush1.msra.mxu0 %v1294
    %1684 = vmatprep.subr.mxu0 0.0
    %1685 = vmatpush1.msra.mxu0 %v1295
    %1686 = vmatprep.subr.mxu0 0.0
    %1687 = vmatpush1.msra.mxu0 %v1296
    %1688 = vmatprep.subr.mxu0 0.0
    %1689 = vmatpush1.msra.mxu0 %v1297
    %1690 = vmatprep.subr.mxu0 0.0
    %1691 = vmatpush1.msra.mxu0 %v1298
    %1692 = vmatprep.subr.mxu0 0.0
    %1693 = vmatpush1.msra.mxu0 %v1299
    %1694 = vmatprep.subr.mxu0 0.0
    %1695 = vmatpush1.msra.mxu0 0.0
    %1696 = vmatprep.subr.mxu0 0.0
    %1697 = vmatpush1.msra.mxu0 0.0
    %1698 = vmatprep.subr.mxu0 0.0
    %1699 = vmatpush1.msra.mxu0 0.0
    %1700 = vmatprep.subr.mxu0 0.0
    %1701 = vmatpush1.msra.mxu0 0.0
    %1702 = vmatprep.subr.mxu0 0.0
    %1703 = vmatpush1.msra.mxu0 0.0
    %1704 = vmatprep.subr.mxu0 0.0
    %1705 = vmatpush1.msra.mxu0 0.0
    %1706 = vmatprep.subr.mxu0 0.0
    %1707 = vmatpush1.msra.mxu0 0.0
    %1708 = vmatprep.subr.mxu0 0.0
    %1709 = vmatpush1.msra.mxu0 0.0
    %1710 = vmatprep.subr.mxu0 0.0
    %1711 = vmatpush1.msra.mxu0 0.0
    %1712 = vmatprep.subr.mxu0 0.0
    %1713 = vmatpush1.msra.mxu0 0.0
    %1714 = vmatprep.subr.mxu0 0.0
    %1715 = vmatpush1.msra.mxu0 0.0
    %1716 = vmatprep.subr.mxu0 0.0
    %1717 = vmatpush1.msra.mxu0 0.0
    %1718 = vmatprep.subr.mxu0 0.0
    %1719 = vmatpush1.msra.mxu0 0.0
    %1720 = vmatprep.subr.mxu0 0.0
    %1721 = vmatpush1.msra.mxu0 0.0
    %1722 = vmatprep.subr.mxu0 0.0
    %1723 = vmatpush1.msra.mxu0 0.0
    %1724 = vmatprep.subr.mxu0 0.0
    %1725 = vmatpush1.msra.mxu0 0.0
    %1726 = vmatprep.subr.mxu0 0.0
    %1727 = vmatpush1.msra.mxu0 0.0
    %1728 = vmatprep.subr.mxu0 0.0
    %1729 = vmatpush1.msra.mxu0 0.0
    %1730 = vmatprep.subr.mxu0 0.0
    %1731 = vmatpush1.msra.mxu0 0.0
    %1732 = vmatprep.subr.mxu0 0.0
    %1733 = vmatpush1.msra.mxu0 0.0
    %1734 = vmatprep.subr.mxu0 0.0
    %1735 = vmatpush1.msra.mxu0 0.0
    %1736 = vmatprep.subr.mxu0 0.0
    %1737 = vmatpush1.msra.mxu0 0.0
    %1738 = vmatprep.subr.mxu0 0.0
    %1739 = vmatpush1.msra.mxu0 0.0
    %1740 = vmatprep.subr.mxu0 0.0
    %1741 = vmatpush1.msra.mxu0 0.0
    %1742 = vmatprep.mubr.f32.mxu0 0.0
    %1743 = vmatmul.mubr.f32.gmra.mrb[0].mxu0 %v1676
    %v1744 = vpop.f32.mrb[0].mxu0
    %v1745 = vadd.f32 0.0, %v1744
    %v1746 = vpop.f32.mrb[0].mxu0
    %1747 = vdwg.mxu0
    %v1748 = vadd.f32 %v1601, %v1745
    %v1749 = vmax.f32 %v1748, 0.0
    %v1750 = vld [vmem:[%s13] sm:$0x3]
    %v1751 = vld [vmem:[%s14] sm:$0xff]
    %v1752 = vld [vmem:[%s14 + $0x8] sm:$0xff]
    %v1753 = vld [vmem:[%s14 + $0x10] sm:$0xff]
    %v1754 = vld [vmem:[%s14 + $0x18] sm:$0xff]
    %v1755 = vld [vmem:[%s15] sm:$0x1]
    %vm1756 = vcmask 15360
    %v1758 = vsel %vm1756, %v1750, 0
    %vm1760 = vcmask 1041408
    %v1762 = vsel %vm1760, %v1749, 0
    %1764 = vmatprep.subr.mxu0 0.0
    %1765 = vmatpush1.msra.mxu0 %v1762
    %1766 = vmatprep.subr.mxu0 0.0
    %1767 = vmatpush1.msra.mxu0 0.0
    %1768 = vmatprep.subr.mxu0 0.0
    %1769 = vmatpush1.msra.mxu0 0.0
    %1770 = vmatprep.subr.mxu0 0.0
    %1771 = vmatpush1.msra.mxu0 0.0
    %1772 = vmatprep.subr.mxu0 0.0
    %1773 = vmatpush1.msra.mxu0 0.0
    %1774 = vmatprep.subr.mxu0 0.0
    %1775 = vmatpush1.msra.mxu0 0.0
    %1776 = vmatprep.subr.mxu0 0.0
    %1777 = vmatpush1.msra.mxu0 0.0
    %1778 = vmatprep.subr.mxu0 0.0
    %1779 = vmatpush1.msra.mxu0 0.0
    %1780 = vmatprep.subr.mxu0 0.0
    %1781 = vmatpush1.msra.mxu0 0.0
    %1782 = vmatprep.subr.mxu0 0.0
    %1783 = vmatpush1.msra.mxu0 0.0
    %1784 = vmatprep.subr.mxu0 0.0
    %1785 = vmatpush1.msra.mxu0 0.0
    %1786 = vmatprep.subr.mxu0 0.0
    %1787 = vmatpush1.msra.mxu0 0.0
    %1788 = vmatprep.subr.mxu0 0.0
    %1789 = vmatpush1.msra.mxu0 0.0
    %1790 = vmatprep.subr.mxu0 0.0
    %1791 = vmatpush1.msra.mxu0 0.0
    %1792 = vmatprep.subr.mxu0 0.0
    %1793 = vmatpush1.msra.mxu0 0.0
    %1794 = vmatprep.subr.mxu0 0.0
    %1795 = vmatpush1.msra.mxu0 0.0
    %1796 = vmatprep.subr.mxu0 0.0
    %1797 = vmatpush1.msra.mxu0 0.0
    %1798 = vmatprep.subr.mxu0 0.0
    %1799 = vmatpush1.msra.mxu0 0.0
    %1800 = vmatprep.subr.mxu0 0.0
    %1801 = vmatpush1.msra.mxu0 0.0
    %1802 = vmatprep.subr.mxu0 0.0
    %1803 = vmatpush1.msra.mxu0 0.0
    %1804 = vmatprep.subr.mxu0 0.0
    %1805 = vmatpush1.msra.mxu0 0.0
    %1806 = vmatprep.subr.mxu0 0.0
    %1807 = vmatpush1.msra.mxu0 0.0
    %1808 = vmatprep.subr.mxu0 0.0
    %1809 = vmatpush1.msra.mxu0 0.0
    %1810 = vmatprep.subr.mxu0 0.0
    %1811 = vmatpush1.msra.mxu0 0.0
    %1812 = vmatprep.subr.mxu0 0.0
    %1813 = vmatpush1.msra.mxu0 0.0
    %1814 = vmatprep.subr.mxu0 0.0
    %1815 = vmatpush1.msra.mxu0 0.0
    %1816 = vmatprep.subr.mxu0 0.0
    %1817 = vmatpush1.msra.mxu0 0.0
    %1818 = vmatprep.subr.mxu0 0.0
    %1819 = vmatpush1.msra.mxu0 0.0
    %1820 = vmatprep.subr.mxu0 0.0
    %1821 = vmatpush1.msra.mxu0 0.0
    %1822 = vmatprep.subr.mxu0 0.0
    %1823 = vmatpush1.msra.mxu0 0.0
    %1824 = vmatprep.subr.mxu0 0.0
    %1825 = vmatpush1.msra.mxu0 0.0
    %1826 = vmatprep.subr.mxu0 0.0
    %1827 = vmatpush1.msra.mxu0 0.0
    %1828 = vmatprep.mubr.f32.mxu0 0.0
    %1829 = vmatmul.mubr.f32.gmra.mrb[0].mxu0 %v1758
    %v1830 = vpop.f32.mrb[0].mxu0
    %v1831 = vadd.f32 0.0, %v1830
    %v1832 = vpop.f32.mrb[0].mxu0
    %1833 = vdwg.mxu0
    %v1835 = vsel %vm95, %v1831, 0
    %1837 = vmatprep.subr.mxu0 0.0
    %1838 = vmatpush1.msra.mxu0 %v1751
    %1839 = vmatprep.subr.mxu0 0.0
    %1840 = vmatpush1.msra.mxu0 %v1752
    %1841 = vmatprep.subr.mxu0 0.0
    %1842 = vmatpush1.msra.mxu0 %v1753
    %1843 = vmatprep.subr.mxu0 0.0
    %1844 = vmatpush1.msra.mxu0 %v1754
    %1845 = vmatprep.subr.mxu0 0.0
    %1846 = vmatpush1.msra.mxu0 0.0
    %1847 = vmatprep.subr.mxu0 0.0
    %1848 = vmatpush1.msra.mxu0 0.0
    %1849 = vmatprep.subr.mxu0 0.0
    %1850 = vmatpush1.msra.mxu0 0.0
    %1851 = vmatprep.subr.mxu0 0.0
    %1852 = vmatpush1.msra.mxu0 0.0
    %1853 = vmatprep.subr.mxu0 0.0
    %1854 = vmatpush1.msra.mxu0 0.0
    %1855 = vmatprep.subr.mxu0 0.0
    %1856 = vmatpush1.msra.mxu0 0.0
    %1857 = vmatprep.subr.mxu0 0.0
    %1858 = vmatpush1.msra.mxu0 0.0
    %1859 = vmatprep.subr.mxu0 0.0
    %1860 = vmatpush1.msra.mxu0 0.0
    %1861 = vmatprep.subr.mxu0 0.0
    %1862 = vmatpush1.msra.mxu0 0.0
    %1863 = vmatprep.subr.mxu0 0.0
    %1864 = vmatpush1.msra.mxu0 0.0
    %1865 = vmatprep.subr.mxu0 0.0
    %1866 = vmatpush1.msra.mxu0 0.0
    %1867 = vmatprep.subr.mxu0 0.0
    %1868 = vmatpush1.msra.mxu0 0.0
    %1869 = vmatprep.subr.mxu0 0.0
    %1870 = vmatpush1.msra.mxu0 0.0
    %1871 = vmatprep.subr.mxu0 0.0
    %1872 = vmatpush1.msra.mxu0 0.0
    %1873 = vmatprep.subr.mxu0 0.0
    %1874 = vmatpush1.msra.mxu0 0.0
    %1875 = vmatprep.subr.mxu0 0.0
    %1876 = vmatpush1.msra.mxu0 0.0
    %1877 = vmatprep.subr.mxu0 0.0
    %1878 = vmatpush1.msra.mxu0 0.0
    %1879 = vmatprep.subr.mxu0 0.0
    %1880 = vmatpush1.msra.mxu0 0.0
    %1881 = vmatprep.subr.mxu0 0.0
    %1882 = vmatpush1.msra.mxu0 0.0
    %1883 = vmatprep.subr.mxu0 0.0
    %1884 = vmatpush1.msra.mxu0 0.0
    %1885 = vmatprep.subr.mxu0 0.0
    %1886 = vmatpush1.msra.mxu0 0.0
    %1887 = vmatprep.subr.mxu0 0.0
    %1888 = vmatpush1.msra.mxu0 0.0
    %1889 = vmatprep.subr.mxu0 0.0
    %1890 = vmatpush1.msra.mxu0 0.0
    %1891 = vmatprep.subr.mxu0 0.0
    %1892 = vmatpush1.msra.mxu0 0.0
    %1893 = vmatprep.subr.mxu0 0.0
    %1894 = vmatpush1.msra.mxu0 0.0
    %1895 = vmatprep.subr.mxu0 0.0
    %1896 = vmatpush1.msra.mxu0 0.0
    %1897 = vmatprep.subr.mxu0 0.0
    %1898 = vmatpush1.msra.mxu0 0.0
    %1899 = vmatprep.subr.mxu0 0.0
    %1900 = vmatpush1.msra.mxu0 0.0
    %1901 = vmatprep.mubr.f32.mxu0 0.0
    %1902 = vmatmul.mubr.f32.gmra.mrb[0].mxu0 %v1835
    %v1903 = vpop.f32.mrb[0].mxu0
    %v1904 = vadd.f32 0.0, %v1903
    %v1905 = vpop.f32.mrb[0].mxu0
    %1906 = vdwg.mxu0
    %v1908 = vlaneseq
    %v1909 = vshrl.u32 %v1908, 7
    %v1910 = vsub.s32 0, %v1909
    %v1911 = vrot.slane %v1755, %v1910
    %v1913 = vadd.f32 %v1911, %v1904
    %v1914 = vmax.f32 %v1913, 0.0
    %v1915 = vld [vmem:[%s16] sm:$0xff]
    %v1916 = vld [vmem:[%s16 + $0x8] sm:$0xff]
    %v1917 = vld [vmem:[%s16 + $0x10] sm:$0xff]
    %v1918 = vld [vmem:[%s16 + $0x18] sm:$0xff]
    %v1919 = vld [vmem:[%s16 + $0x20] sm:$0xff]
    %v1920 = vld [vmem:[%s16 + $0x28] sm:$0xff]
    %v1921 = vld [vmem:[%s16 + $0x30] sm:$0xff]
    %v1922 = vld [vmem:[%s16 + $0x38] sm:$0xff]
    %v1923 = vld [vmem:[%s16 + $0x40] sm:$0xff]
    %v1924 = vld [vmem:[%s16 + $0x48] sm:$0xff]
    %v1925 = vld [vmem:[%s16 + $0x50] sm:$0xff]
    %v1926 = vld [vmem:[%s16 + $0x58] sm:$0xff]
    %v1927 = vld [vmem:[%s16 + $0x60] sm:$0xff]
    %v1928 = vld [vmem:[%s16 + $0x68] sm:$0xff]
    %v1929 = vld [vmem:[%s16 + $0x70] sm:$0xff]
    %v1930 = vld [vmem:[%s16 + $0x78] sm:$0xff]
    %v1931 = vld [vmem:[%s17] sm:$0x1]
    %v1933 = vlaneseq
    %v1934 = vshrl.u32 %v1933, 7
    %v1935 = vsub.s32 0, %v1934
    %v1936 = vrot.slane %v1931, %v1935
    %1938 = vmatprep.subr.mxu0 0.0
    %1939 = vmatpush1.msra.mxu0 %v1915
    %1940 = vmatprep.subr.mxu0 0.0
    %1941 = vmatpush1.msra.mxu0 %v1916
    %1942 = vmatprep.subr.mxu0 0.0
    %1943 = vmatpush1.msra.mxu0 %v1917
    %1944 = vmatprep.subr.mxu0 0.0
    %1945 = vmatpush1.msra.mxu0 %v1918
    %1946 = vmatprep.subr.mxu0 0.0
    %1947 = vmatpush1.msra.mxu0 %v1919
    %1948 = vmatprep.subr.mxu0 0.0
    %1949 = vmatpush1.msra.mxu0 %v1920
    %1950 = vmatprep.subr.mxu0 0.0
    %1951 = vmatpush1.msra.mxu0 %v1921
    %1952 = vmatprep.subr.mxu0 0.0
    %1953 = vmatpush1.msra.mxu0 %v1922
    %1954 = vmatprep.subr.mxu0 0.0
    %1955 = vmatpush1.msra.mxu0 %v1923
    %1956 = vmatprep.subr.mxu0 0.0
    %1957 = vmatpush1.msra.mxu0 %v1924
    %1958 = vmatprep.subr.mxu0 0.0
    %1959 = vmatpush1.msra.mxu0 %v1925
    %1960 = vmatprep.subr.mxu0 0.0
    %1961 = vmatpush1.msra.mxu0 %v1926
    %1962 = vmatprep.subr.mxu0 0.0
    %1963 = vmatpush1.msra.mxu0 %v1927
    %1964 = vmatprep.subr.mxu0 0.0
    %1965 = vmatpush1.msra.mxu0 %v1928
    %1966 = vmatprep.subr.mxu0 0.0
    %1967 = vmatpush1.msra.mxu0 %v1929
    %1968 = vmatprep.subr.mxu0 0.0
    %1969 = vmatpush1.msra.mxu0 %v1930
    %1970 = vmatprep.subr.mxu0 0.0
    %1971 = vmatpush1.msra.mxu0 0.0
    %1972 = vmatprep.subr.mxu0 0.0
    %1973 = vmatpush1.msra.mxu0 0.0
    %1974 = vmatprep.subr.mxu0 0.0
    %1975 = vmatpush1.msra.mxu0 0.0
    %1976 = vmatprep.subr.mxu0 0.0
    %1977 = vmatpush1.msra.mxu0 0.0
    %1978 = vmatprep.subr.mxu0 0.0
    %1979 = vmatpush1.msra.mxu0 0.0
    %1980 = vmatprep.subr.mxu0 0.0
    %1981 = vmatpush1.msra.mxu0 0.0
    %1982 = vmatprep.subr.mxu0 0.0
    %1983 = vmatpush1.msra.mxu0 0.0
    %1984 = vmatprep.subr.mxu0 0.0
    %1985 = vmatpush1.msra.mxu0 0.0
    %1986 = vmatprep.subr.mxu0 0.0
    %1987 = vmatpush1.msra.mxu0 0.0
    %1988 = vmatprep.subr.mxu0 0.0
    %1989 = vmatpush1.msra.mxu0 0.0
    %1990 = vmatprep.subr.mxu0 0.0
    %1991 = vmatpush1.msra.mxu0 0.0
    %1992 = vmatprep.subr.mxu0 0.0
    %1993 = vmatpush1.msra.mxu0 0.0
    %1994 = vmatprep.subr.mxu0 0.0
    %1995 = vmatpush1.msra.mxu0 0.0
    %1996 = vmatprep.subr.mxu0 0.0
    %1997 = vmatpush1.msra.mxu0 0.0
    %1998 = vmatprep.subr.mxu0 0.0
    %1999 = vmatpush1.msra.mxu0 0.0
    %2000 = vmatprep.subr.mxu0 0.0
    %2001 = vmatpush1.msra.mxu0 0.0
    %2002 = vmatprep.mubr.f32.mxu0 0.0
    %2003 = vmatmul.mubr.f32.gmra.mrb[0].mxu0 %v1914
    %v2004 = vpop.f32.mrb[0].mxu0
    %v2005 = vadd.f32 %v1936, %v2004
    %v2006 = vpop.f32.mrb[0].mxu0
    %2007 = vdwg.mxu0
    %vm2008 = vcmask 58368
    %2009 = vst.msk [vmem:[#allocation2] sm:$0x3] %vm2008, %v2005
    // Predicated region
    $region74: #{encoder_forward.1} parent=1 // pred_check
      _
    $region75: #{encoder_forward.1} parent=1 // pred_check_branch
      %2011 = sbr.rel (0) target = $region77
    $region76: #{encoder_forward.1} parent=1 // pred_region
      %s2013 = ssub.s32 32, 32
      %2014 = vsyncadd [#allocation3], %s2013
      %s2016 = sshll.u32 [#allocation2], 4
      %s2017 = int_to_ptr.vmem [resolvable:$true] %s2016
      %2019 = dma.vmem_to_hbm [thread:$0]  %s2017, 32, %s18, [#allocation3]
    $region77: #{encoder_forward.1} parent=1 // pred_fallthru
      _
    // Predicated region
    $region78: #{encoder_forward.1} parent=1 // pred_check
      _
    $region79: #{encoder_forward.1} parent=1 // pred_check_branch
      %2021 = sbr.rel (0) target = $region81
    $region80: #{encoder_forward.1} parent=1 // pred_region
      %2022 = dma.done [#allocation3], 32
    $region81: #{encoder_forward.1} parent=1 // pred_fallthru
      _
    %2023 = vsyncpa [#allocation3], 1

</llo_original>
